<compile_context>
chip_gen: v5e
topology: v5e:2x2
jax: 0.10.0
libtpu: 0.0.40
codegen_flags: <defaults>
</compile_context>

<pallas_src>
import functools

import jax
import jax.numpy as jnp
from jax import lax
from jax.experimental import pallas as pl
from jax.experimental.pallas import tpu as pltpu


def _bottleneck_kernel(*refs, stride, has_downsample):
    if has_downsample:
        (x_ref, w1_ref, w2_ref, w3_ref, ws_ref,
         b1_ref, b2_ref, bc_ref, o_ref, pad_ref) = refs
    else:
        (x_ref, w1_ref, w2_ref, w3_ref,
         b1_ref, b2_ref, bc_ref, o_ref, pad_ref) = refs
        ws_ref = None

    H, W, Cin = x_ref.shape[1], x_ref.shape[2], x_ref.shape[3]
    P = w1_ref.shape[1]
    C4 = w3_ref.shape[1]
    Ho = (H - 1) // stride + 1
    Wo = (W - 1) // stride + 1

    x = x_ref[0]                                           # (H, W, Cin) bf16

    # ---- conv1 (1x1, bn1 scale folded into w1) + bias + relu ----
    h1 = jnp.dot(x.reshape(H * W, Cin), w1_ref[...],
                 preferred_element_type=jnp.float32)       # bf16 x bf16 -> f32
    h1 = jnp.maximum(h1 + b1_ref[...], 0.0).reshape(H, W, P)

    # ---- conv2 (3x3, pad=1, stride, bn2 scale folded) + bias + relu ----
    # Zero only the 1-pixel border; the interior is fully overwritten below.
    zrow = jnp.zeros((1, W + 2, P), jnp.float32)
    zcol = jnp.zeros((H + 2, 1, P), jnp.float32)
    pad_ref[0:1, :, :] = zrow
    pad_ref[H + 1:H + 2, :, :] = zrow
    pad_ref[:, 0:1, :] = zcol
    pad_ref[:, W + 1:W + 2, :] = zcol
    pad_ref[1:H + 1, 1:W + 1, :] = h1
    padded = pad_ref[...]                                  # (H+2, W+2, P)

    # im2col: one matmul with K = 9*P instead of 9 accumulating matmuls.
    cols = []
    for ky in range(3):                                    # static unroll
        for kx in range(3):
            if stride == 1:
                win = padded[ky:ky + Ho, kx:kx + Wo, :]
            else:
                win = lax.slice(
                    padded, (ky, kx, 0),
                    (ky + (Ho - 1) * stride + 1,
                     kx + (Wo - 1) * stride + 1, P),
                    (stride, stride, 1))
            cols.append(win.reshape(Ho * Wo, P))
    im = jnp.concatenate(cols, axis=-1).astype(jnp.bfloat16)   # (Ho*Wo, 9P)
    h2 = jnp.dot(im, w2_ref[...], preferred_element_type=jnp.float32)
    h2 = jnp.maximum(h2 + b2_ref[...], 0.0).astype(jnp.bfloat16)

    # ---- conv3 (1x1, bn3 scale folded) ----
    h3 = jnp.dot(h2, w3_ref[...], preferred_element_type=jnp.float32)

    # ---- shortcut: 1x1 projection + folded BN, or identity ----
    if stride == 1:
        xs = x
    else:
        xs = lax.slice(x, (0, 0, 0),
                       ((Ho - 1) * stride + 1, (Wo - 1) * stride + 1, Cin),
                       (stride, stride, 1))
    xs = xs.reshape(Ho * Wo, Cin)
    if has_downsample:
        hs = jnp.dot(xs, ws_ref[...], preferred_element_type=jnp.float32)
    else:
        hs = xs.astype(jnp.float32)                        # identity (Cin == C4)

    # ---- residual add (combined bn3 [+ shortcut bn] bias) + final relu ----
    out = jnp.maximum(h3 + hs + bc_ref[...], 0.0)
    o_ref[...] = out.reshape(1, Ho, Wo, C4).astype(o_ref.dtype)


def _fold_params(params, has_downsample):
    """Fold BN scales into conv weights (bf16), keep biases in f32."""
    w1, w2, w3, ws, sb1, sb2, sb3, sbs = params
    P = w1.shape[1]
    w1f = (w1 * sb1[0][None, :]).astype(jnp.bfloat16)                 # (Cin, P)
    w2f = (w2 * sb2[0][None, None, None, :]).reshape(9 * P, P)        # (9P, P)
    w2f = w2f.astype(jnp.bfloat16)
    w3f = (w3 * sb3[0][None, :]).astype(jnp.bfloat16)                 # (P, C4)
    b1 = sb1[1][None, :].astype(jnp.float32)
    b2 = sb2[1][None, :].astype(jnp.float32)
    if has_downsample:
        wsf = (ws * sbs[0][None, :]).astype(jnp.bfloat16)             # (Cin, C4)
        bc = (sb3[1] + sbs[1])[None, :].astype(jnp.float32)
    else:
        wsf = None
        bc = sb3[1][None, :].astype(jnp.float32)
    return w1f, w2f, w3f, wsf, b1, b2, bc


def bottleneck_forward(x_nchw, params, *, stride=1):
    """x_nchw: (N, Cin, H, W) float32 -> (N, 4*planes, Ho, Wo) float32."""
    x = jnp.transpose(x_nchw, (0, 2, 3, 1)).astype(jnp.bfloat16)      # NHWC bf16
    N, H, W, Cin = x.shape
    P, C4 = params[0].shape[1], params[2].shape[1]
    Ho = (H - 1) // stride + 1
    Wo = (W - 1) // stride + 1
    has_downsample = (stride != 1) or (Cin != C4)

    w1f, w2f, w3f, wsf, b1, b2, bc = _fold_params(params, has_downsample)
    inputs = [x, w1f, w2f, w3f] + ([wsf] if has_downsample else []) + [b1, b2, bc]

    def const_spec(shape):
        zeros = (0,) * len(shape)
        return pl.BlockSpec(shape, lambda n, z=zeros: z)

    in_specs = ([pl.BlockSpec((1, H, W, Cin), lambda n: (n, 0, 0, 0))]
                + [const_spec(a.shape) for a in inputs[1:]])

    kernel = functools.partial(_bottleneck_kernel, stride=stride,
                               has_downsample=has_downsample)
    out = pl.pallas_call(
        kernel,
        out_shape=jax.ShapeDtypeStruct((N, Ho, Wo, C4), jnp.float32),
        grid_spec=pltpu.PrefetchScalarGridSpec(
            num_scalar_prefetch=0,
            grid=(N,),
            in_specs=in_specs,
            out_specs=pl.BlockSpec((1, Ho, Wo, C4), lambda n: (n, 0, 0, 0)),
            scratch_shapes=[pltpu.VMEM((H + 2, W + 2, P), jnp.float32)],
        ),
        compiler_params=pltpu.CompilerParams(
            dimension_semantics=("parallel",)),
    )(*inputs)
    return jnp.transpose(out, (0, 3, 1, 2))                           # NCHW


def init_params(key, in_planes, planes, expansion=4, eps=1e-5):
    """Deterministic synthetic parameters (conv weights + BN scale/bias)."""
    C4 = expansion * planes
    keys = jax.random.split(key, 8)

    def conv_w(k, cin, cout, kh=1, kw=1):
        fan_in = cin * kh * kw
        return (jax.random.normal(k, (kh, kw, cin, cout), jnp.float32)
                / jnp.sqrt(float(fan_in)))

    w1 = conv_w(keys[0], in_planes, planes)[0, 0]           # (Cin, P)
    w2 = conv_w(keys[1], planes, planes, 3, 3)              # (3, 3, P, P) HWIO
    w3 = conv_w(keys[2], planes, C4)[0, 0]                  # (P, 4P)
    ws = conv_w(keys[3], in_planes, C4)[0, 0]               # (Cin, 4P)

    def bn_sb(k, c):
        kg, kb, km, kv = jax.random.split(k, 4)
        gamma = 1.0 + 0.1 * jax.random.normal(kg, (c,), jnp.float32)
        beta = 0.1 * jax.random.normal(kb, (c,), jnp.float32)
        mean = 0.1 * jax.random.normal(km, (c,), jnp.float32)
        var = jnp.abs(jax.random.normal(kv, (c,), jnp.float32)) + 0.5
        scale = gamma / jnp.sqrt(var + eps)
        bias = beta - mean * scale
        return jnp.stack([scale, bias], axis=0)             # (2, c)

    sb1 = bn_sb(keys[4], planes)
    sb2 = bn_sb(keys[5], planes)
    sb3 = bn_sb(keys[6], C4)
    sbs = bn_sb(keys[7], C4)
    return (w1, w2, w3, ws, sb1, sb2, sb3, sbs)


def reference_forward(x_nchw, params, *, stride=1):
    """Pure-JAX f32 reference with the exact PyTorch Bottleneck semantics."""
    x = jnp.transpose(x_nchw, (0, 2, 3, 1))
    w1, w2, w3, ws, sb1, sb2, sb3, sbs = params
    Cin, C4 = x.shape[-1], w3.shape[1]
    dn = ('NHWC', 'HWIO', 'NHWC')

    def conv(t, w, s=1, pad='VALID'):
        return lax.conv_general_dilated(t, w, (s, s), pad, dimension_numbers=dn)

    h = conv(x, w1[None, None])
    h = jax.nn.relu(h * sb1[0] + sb1[1])
    h = conv(h, w2, stride, ((1, 1), (1, 1)))
    h = jax.nn.relu(h * sb2[0] + sb2[1])
    h = conv(h, w3[None, None])
    h = h * sb3[0] + sb3[1]
    if stride != 1 or Cin != C4:
        s = conv(x, ws[None, None], stride)
        s = s * sbs[0] + sbs[1]
    else:
        s = x                                               # identity shortcut
    out = jax.nn.relu(h + s)
    return jnp.transpose(out, (0, 3, 1, 2))


if __name__ == "__main__":
    key = jax.random.PRNGKey(0)
    kx1, kp1, kx2, kp2 = jax.random.split(key, 4)

    # Case 1: projection shortcut (in_planes != 4*planes), stride=1.
    N, Cin, H, W, planes = 2, 4, 16, 16, 4
    x1 = jax.random.normal(kx1, (N, Cin, H, W), jnp.float32)
    p1 = init_params(kp1, Cin, planes)
    out1 = jax.block_until_ready(bottleneck_forward(x1, p1, stride=1))
    ref1 = reference_forward(x1, p1, stride=1)
    assert out1.shape == (N, 4 * planes, H, W), out1.shape
    err1 = float(jnp.max(jnp.abs(out1 - ref1)))
    assert jnp.allclose(out1, ref1, atol=5e-2, rtol=5e-2), err1   # bf16 tolerance

    # Case 2: identity shortcut (in_planes == 4*planes), stride=1.
    Cin2 = 4 * planes
    x2 = jax.random.normal(kx2, (N, Cin2, H, W), jnp.float32)
    p2 = init_params(kp2, Cin2, planes)
    out2 = jax.block_until_ready(bottleneck_forward(x2, p2, stride=1))
    ref2 = reference_forward(x2, p2, stride=1)
    assert out2.shape == (N, 4 * planes, H, W), out2.shape
    err2 = float(jnp.max(jnp.abs(out2 - ref2)))
    assert jnp.allclose(out2, ref2, atol=5e-2, rtol=5e-2), err2

    print("KERNEL_OK")
</pallas_src>

<mosaic_0001>
module attributes {stable_mosaic.version = 11 : i64} {
  func.func @_bottleneck_kernel(%arg0: i32, %arg1: memref<1x16x16x4xbf16, #tpu.memory_space<vmem>>, %arg2: memref<4x4xbf16, #tpu.memory_space<vmem>>, %arg3: memref<36x4xbf16, #tpu.memory_space<vmem>>, %arg4: memref<4x16xbf16, #tpu.memory_space<vmem>>, %arg5: memref<4x16xbf16, #tpu.memory_space<vmem>>, %arg6: memref<1x4xf32, #tpu.memory_space<vmem>>, %arg7: memref<1x4xf32, #tpu.memory_space<vmem>>, %arg8: memref<1x16xf32, #tpu.memory_space<vmem>>, %arg9: memref<1x16x16x16xf32, #tpu.memory_space<vmem>>, %arg10: memref<18x18x4xf32, #tpu.memory_space<vmem>>) attributes {dimension_semantics = [#tpu.dimension_semantics<parallel>], iteration_bounds = array<i64: 2>, scalar_prefetch = 0 : i64, scratch_operands = 1 : i64, tpu.core_type = #tpu.core_type<tc>, window_params = [{transform_indices = @transform_0, window_bounds = array<i64: 1, 16, 16, 4>}, {pipeline_mode = #tpu.pipeline_mode<synchronous>, transform_indices = @transform_1, window_bounds = array<i64: 4, 4>}, {pipeline_mode = #tpu.pipeline_mode<synchronous>, transform_indices = @transform_2, window_bounds = array<i64: 36, 4>}, {pipeline_mode = #tpu.pipeline_mode<synchronous>, transform_indices = @transform_3, window_bounds = array<i64: 4, 16>}, {pipeline_mode = #tpu.pipeline_mode<synchronous>, transform_indices = @transform_4, window_bounds = array<i64: 4, 16>}, {pipeline_mode = #tpu.pipeline_mode<synchronous>, transform_indices = @transform_5, window_bounds = array<i64: 1, 4>}, {pipeline_mode = #tpu.pipeline_mode<synchronous>, transform_indices = @transform_6, window_bounds = array<i64: 1, 4>}, {pipeline_mode = #tpu.pipeline_mode<synchronous>, transform_indices = @transform_7, window_bounds = array<i64: 1, 16>}, {transform_indices = @transform_8, window_bounds = array<i64: 1, 16, 16, 16>}]} {
    %c0 = arith.constant 0 : index
    %c0_0 = arith.constant 0 : index
    %c0_1 = arith.constant 0 : index
    %c0_2 = arith.constant 0 : index
    %0 = vector.load %arg1[%c0, %c0_0, %c0_1, %c0_2] : memref<1x16x16x4xbf16, #tpu.memory_space<vmem>>, vector<1x16x16x4xbf16>
    %1 = vector.shape_cast %0 : vector<1x16x16x4xbf16> to vector<16x16x4xbf16>
    %2 = vector.shape_cast %1 : vector<16x16x4xbf16> to vector<256x4xbf16>
    %c0_3 = arith.constant 0 : index
    %c0_4 = arith.constant 0 : index
    %3 = vector.load %arg2[%c0_3, %c0_4] : memref<4x4xbf16, #tpu.memory_space<vmem>>, vector<4x4xbf16>
    %cst = arith.constant dense<0.000000e+00> : vector<256x4xf32>
    %4 = tpu.matmul %2, %3, %cst {dimension_numbers = #tpu.dot_dimension_numbers<[1], [0], [0], [1], [0, 0, 1, 1], [], []>} : vector<256x4xbf16>, vector<4x4xbf16>, vector<256x4xf32> -> vector<256x4xf32>
    %c0_5 = arith.constant 0 : index
    %c0_6 = arith.constant 0 : index
    %5 = vector.load %arg6[%c0_5, %c0_6] : memref<1x4xf32, #tpu.memory_space<vmem>>, vector<1x4xf32>
    %6 = vector.broadcast %5 : vector<1x4xf32> to vector<256x4xf32>
    %7 = arith.addf %4, %6 : vector<256x4xf32>
    %cst_7 = arith.constant 0.000000e+00 : f32
    %8 = vector.broadcast %cst_7 : f32 to vector<256x4xf32>
    %9 = arith.maximumf %7, %8 : vector<256x4xf32>
    %10 = vector.shape_cast %9 : vector<256x4xf32> to vector<16x16x4xf32>
    %cst_8 = arith.constant 0.000000e+00 : f32
    %11 = vector.broadcast %cst_8 : f32 to vector<1x18x4xf32>
    %cst_9 = arith.constant 0.000000e+00 : f32
    %12 = vector.broadcast %cst_9 : f32 to vector<18x1x4xf32>
    %c0_10 = arith.constant 0 : index
    %c0_11 = arith.constant 0 : index
    %c0_12 = arith.constant 0 : index
    %13 = vector.load %arg10[%c0_10, %c0_11, %c0_12] : memref<18x18x4xf32, #tpu.memory_space<vmem>>, vector<1x18x4xf32>
    tpu.vector_store %arg10[%c0_10, %c0_11, %c0_12], %11 {strides = array<i32>} : memref<18x18x4xf32, #tpu.memory_space<vmem>>, vector<1x18x4xf32>,
    %c17 = arith.constant 17 : index
    %c0_13 = arith.constant 0 : index
    %c0_14 = arith.constant 0 : index
    %14 = vector.load %arg10[%c17, %c0_13, %c0_14] : memref<18x18x4xf32, #tpu.memory_space<vmem>>, vector<1x18x4xf32>
    tpu.vector_store %arg10[%c17, %c0_13, %c0_14], %11 {strides = array<i32>} : memref<18x18x4xf32, #tpu.memory_space<vmem>>, vector<1x18x4xf32>,
    %c0_15 = arith.constant 0 : index
    %c0_16 = arith.constant 0 : index
    %c0_17 = arith.constant 0 : index
    %15 = vector.load %arg10[%c0_15, %c0_16, %c0_17] : memref<18x18x4xf32, #tpu.memory_space<vmem>>, vector<18x1x4xf32>
    tpu.vector_store %arg10[%c0_15, %c0_16, %c0_17], %12 {strides = array<i32>} : memref<18x18x4xf32, #tpu.memory_space<vmem>>, vector<18x1x4xf32>,
    %c0_18 = arith.constant 0 : index
    %c17_19 = arith.constant 17 : index
    %c0_20 = arith.constant 0 : index
    %16 = vector.load %arg10[%c0_18, %c17_19, %c0_20] : memref<18x18x4xf32, #tpu.memory_space<vmem>>, vector<18x1x4xf32>
    tpu.vector_store %arg10[%c0_18, %c17_19, %c0_20], %12 {strides = array<i32>} : memref<18x18x4xf32, #tpu.memory_space<vmem>>, vector<18x1x4xf32>,
    %c1 = arith.constant 1 : index
    %c1_21 = arith.constant 1 : index
    %c0_22 = arith.constant 0 : index
    %17 = vector.load %arg10[%c1, %c1_21, %c0_22] : memref<18x18x4xf32, #tpu.memory_space<vmem>>, vector<16x16x4xf32>
    tpu.vector_store %arg10[%c1, %c1_21, %c0_22], %10 {strides = array<i32>} : memref<18x18x4xf32, #tpu.memory_space<vmem>>, vector<16x16x4xf32>,
    %c0_23 = arith.constant 0 : index
    %c0_24 = arith.constant 0 : index
    %c0_25 = arith.constant 0 : index
    %18 = vector.load %arg10[%c0_23, %c0_24, %c0_25] : memref<18x18x4xf32, #tpu.memory_space<vmem>>, vector<18x18x4xf32>
    %19 = vector.extract_strided_slice %18 {offsets = [0, 0, 0], sizes = [16, 16, 4], strides = [1, 1, 1]} : vector<18x18x4xf32> to vector<16x16x4xf32>
    %20 = vector.shape_cast %19 : vector<16x16x4xf32> to vector<256x4xf32>
    %21 = vector.extract_strided_slice %18 {offsets = [0, 1, 0], sizes = [16, 16, 4], strides = [1, 1, 1]} : vector<18x18x4xf32> to vector<16x16x4xf32>
    %22 = vector.shape_cast %21 : vector<16x16x4xf32> to vector<256x4xf32>
    %23 = vector.extract_strided_slice %18 {offsets = [0, 2, 0], sizes = [16, 16, 4], strides = [1, 1, 1]} : vector<18x18x4xf32> to vector<16x16x4xf32>
    %24 = vector.shape_cast %23 : vector<16x16x4xf32> to vector<256x4xf32>
    %25 = vector.extract_strided_slice %18 {offsets = [1, 0, 0], sizes = [16, 16, 4], strides = [1, 1, 1]} : vector<18x18x4xf32> to vector<16x16x4xf32>
    %26 = vector.shape_cast %25 : vector<16x16x4xf32> to vector<256x4xf32>
    %27 = vector.extract_strided_slice %18 {offsets = [1, 1, 0], sizes = [16, 16, 4], strides = [1, 1, 1]} : vector<18x18x4xf32> to vector<16x16x4xf32>
    %28 = vector.shape_cast %27 : vector<16x16x4xf32> to vector<256x4xf32>
    %29 = vector.extract_strided_slice %18 {offsets = [1, 2, 0], sizes = [16, 16, 4], strides = [1, 1, 1]} : vector<18x18x4xf32> to vector<16x16x4xf32>
    %30 = vector.shape_cast %29 : vector<16x16x4xf32> to vector<256x4xf32>
    %31 = vector.extract_strided_slice %18 {offsets = [2, 0, 0], sizes = [16, 16, 4], strides = [1, 1, 1]} : vector<18x18x4xf32> to vector<16x16x4xf32>
    %32 = vector.shape_cast %31 : vector<16x16x4xf32> to vector<256x4xf32>
    %33 = vector.extract_strided_slice %18 {offsets = [2, 1, 0], sizes = [16, 16, 4], strides = [1, 1, 1]} : vector<18x18x4xf32> to vector<16x16x4xf32>
    %34 = vector.shape_cast %33 : vector<16x16x4xf32> to vector<256x4xf32>
    %35 = vector.extract_strided_slice %18 {offsets = [2, 2, 0], sizes = [16, 16, 4], strides = [1, 1, 1]} : vector<18x18x4xf32> to vector<16x16x4xf32>
    %36 = vector.shape_cast %35 : vector<16x16x4xf32> to vector<256x4xf32>
    %37 = tpu.concatenate %20, %22, %24, %26, %28, %30, %32, %34, %36 in 1 : vector<256x4xf32>, vector<256x4xf32>, vector<256x4xf32>, vector<256x4xf32>, vector<256x4xf32>, vector<256x4xf32>, vector<256x4xf32>, vector<256x4xf32>, vector<256x4xf32> -> vector<256x36xf32>
    %38 = arith.truncf %37 : vector<256x36xf32> to vector<256x36xbf16>
    %c0_26 = arith.constant 0 : index
    %c0_27 = arith.constant 0 : index
    %39 = vector.load %arg3[%c0_26, %c0_27] : memref<36x4xbf16, #tpu.memory_space<vmem>>, vector<36x4xbf16>
    %cst_28 = arith.constant dense<0.000000e+00> : vector<256x4xf32>
    %40 = tpu.matmul %38, %39, %cst_28 {dimension_numbers = #tpu.dot_dimension_numbers<[1], [0], [0], [1], [0, 0, 1, 1], [], []>} : vector<256x36xbf16>, vector<36x4xbf16>, vector<256x4xf32> -> vector<256x4xf32>
    %c0_29 = arith.constant 0 : index
    %c0_30 = arith.constant 0 : index
    %41 = vector.load %arg7[%c0_29, %c0_30] : memref<1x4xf32, #tpu.memory_space<vmem>>, vector<1x4xf32>
    %42 = vector.broadcast %41 : vector<1x4xf32> to vector<256x4xf32>
    %43 = arith.addf %40, %42 : vector<256x4xf32>
    %cst_31 = arith.constant 0.000000e+00 : f32
    %44 = vector.broadcast %cst_31 : f32 to vector<256x4xf32>
    %45 = arith.maximumf %43, %44 : vector<256x4xf32>
    %46 = arith.truncf %45 : vector<256x4xf32> to vector<256x4xbf16>
    %c0_32 = arith.constant 0 : index
    %c0_33 = arith.constant 0 : index
    %47 = vector.load %arg4[%c0_32, %c0_33] : memref<4x16xbf16, #tpu.memory_space<vmem>>, vector<4x16xbf16>
    %cst_34 = arith.constant dense<0.000000e+00> : vector<256x16xf32>
    %48 = tpu.matmul %46, %47, %cst_34 {dimension_numbers = #tpu.dot_dimension_numbers<[1], [0], [0], [1], [0, 0, 1, 1], [], []>} : vector<256x4xbf16>, vector<4x16xbf16>, vector<256x16xf32> -> vector<256x16xf32>
    %49 = vector.shape_cast %1 : vector<16x16x4xbf16> to vector<256x4xbf16>
    %c0_35 = arith.constant 0 : index
    %c0_36 = arith.constant 0 : index
    %50 = vector.load %arg5[%c0_35, %c0_36] : memref<4x16xbf16, #tpu.memory_space<vmem>>, vector<4x16xbf16>
    %cst_37 = arith.constant dense<0.000000e+00> : vector<256x16xf32>
    %51 = tpu.matmul %49, %50, %cst_37 {dimension_numbers = #tpu.dot_dimension_numbers<[1], [0], [0], [1], [0, 0, 1, 1], [], []>} : vector<256x4xbf16>, vector<4x16xbf16>, vector<256x16xf32> -> vector<256x16xf32>
    %52 = arith.addf %48, %51 : vector<256x16xf32>
    %c0_38 = arith.constant 0 : index
    %c0_39 = arith.constant 0 : index
    %53 = vector.load %arg8[%c0_38, %c0_39] : memref<1x16xf32, #tpu.memory_space<vmem>>, vector<1x16xf32>
    %54 = vector.broadcast %53 : vector<1x16xf32> to vector<256x16xf32>
    %55 = arith.addf %52, %54 : vector<256x16xf32>
    %cst_40 = arith.constant 0.000000e+00 : f32
    %56 = vector.broadcast %cst_40 : f32 to vector<256x16xf32>
    %57 = arith.maximumf %55, %56 : vector<256x16xf32>
    %58 = vector.shape_cast %57 : vector<256x16xf32> to vector<1x16x16x16xf32>
    %c0_41 = arith.constant 0 : index
    %c0_42 = arith.constant 0 : index
    %c0_43 = arith.constant 0 : index
    %c0_44 = arith.constant 0 : index
    %59 = vector.load %arg9[%c0_41, %c0_42, %c0_43, %c0_44] : memref<1x16x16x16xf32, #tpu.memory_space<vmem>>, vector<1x16x16x16xf32>
    tpu.vector_store %arg9[%c0_41, %c0_42, %c0_43, %c0_44], %58 {strides = array<i32>} : memref<1x16x16x16xf32, #tpu.memory_space<vmem>>, vector<1x16x16x16xf32>,
    return
  }
  func.func @transform_0(%arg0: i32) -> (i32, i32, i32, i32) {
    %c0_i32 = arith.constant 0 : i32
    %c0_i32_0 = arith.constant 0 : i32
    %c0_i32_1 = arith.constant 0 : i32
    %c0_i32_2 = arith.constant 0 : i32
    return %arg0, %c0_i32, %c0_i32_0, %c0_i32_1 : i32, i32, i32, i32
  }
  func.func @transform_1(%arg0: i32) -> (i32, i32) {
    %c0_i32 = arith.constant 0 : i32
    %c0_i32_0 = arith.constant 0 : i32
    %c0_i32_1 = arith.constant 0 : i32
    return %c0_i32, %c0_i32_0 : i32, i32
  }
  func.func @transform_2(%arg0: i32) -> (i32, i32) {
    %c0_i32 = arith.constant 0 : i32
    %c0_i32_0 = arith.constant 0 : i32
    %c0_i32_1 = arith.constant 0 : i32
    return %c0_i32, %c0_i32_0 : i32, i32
  }
  func.func @transform_3(%arg0: i32) -> (i32, i32) {
    %c0_i32 = arith.constant 0 : i32
    %c0_i32_0 = arith.constant 0 : i32
    %c0_i32_1 = arith.constant 0 : i32
    return %c0_i32, %c0_i32_0 : i32, i32
  }
  func.func @transform_4(%arg0: i32) -> (i32, i32) {
    %c0_i32 = arith.constant 0 : i32
    %c0_i32_0 = arith.constant 0 : i32
    %c0_i32_1 = arith.constant 0 : i32
    return %c0_i32, %c0_i32_0 : i32, i32
  }
  func.func @transform_5(%arg0: i32) -> (i32, i32) {
    %c0_i32 = arith.constant 0 : i32
    %c0_i32_0 = arith.constant 0 : i32
    %c0_i32_1 = arith.constant 0 : i32
    return %c0_i32, %c0_i32_0 : i32, i32
  }
  func.func @transform_6(%arg0: i32) -> (i32, i32) {
    %c0_i32 = arith.constant 0 : i32
    %c0_i32_0 = arith.constant 0 : i32
    %c0_i32_1 = arith.constant 0 : i32
    return %c0_i32, %c0_i32_0 : i32, i32
  }
  func.func @transform_7(%arg0: i32) -> (i32, i32) {
    %c0_i32 = arith.constant 0 : i32
    %c0_i32_0 = arith.constant 0 : i32
    %c0_i32_1 = arith.constant 0 : i32
    return %c0_i32, %c0_i32_0 : i32, i32
  }
  func.func @transform_8(%arg0: i32) -> (i32, i32, i32, i32) {
    %c0_i32 = arith.constant 0 : i32
    %c0_i32_0 = arith.constant 0 : i32
    %c0_i32_1 = arith.constant 0 : i32
    %c0_i32_2 = arith.constant 0 : i32
    return %arg0, %c0_i32, %c0_i32_0, %c0_i32_1 : i32, i32, i32, i32
  }
}

</mosaic_0001>

<llo_original>
// kernel: tpu_custom_call.1
$region0: #{tpu_custom_call.1}
  #allocation0 [shape = 'u32[]', space=smem, size = 0x4, offset = 0x4, fixed_abs, tag = 'smem constant byte address 0x4 - core index']
  #allocation1 [shape = 'u32[72,128]{1,0:T(1,128)}', space=vmem, size = 0x9000, scoped, tag = 'internal scratch']
  #allocation2 [shape = 'f32[18,18,4]{2,1,0:T(8,128)}', space=vmem, size = 0x36000, scoped, tag = 'scratch operand']
  %s0 = inlined_call_operand.vmem [shape: bf16[2,16,16,4], index: 0, kind: input, shape index: {}]
  %s1 = inlined_call_operand.vmem [shape: bf16[4,4], index: 1, kind: input, shape index: {}]
  %s2 = inlined_call_operand.vmem [shape: bf16[36,4], index: 2, kind: input, shape index: {}]
  %s3 = inlined_call_operand.vmem [shape: bf16[4,16], index: 3, kind: input, shape index: {}]
  %s4 = inlined_call_operand.vmem [shape: bf16[4,16], index: 4, kind: input, shape index: {}]
  %s5 = inlined_call_operand.vmem [shape: f32[1,4], index: 5, kind: input, shape index: {}]
  %s6 = inlined_call_operand.vmem [shape: f32[1,4], index: 6, kind: input, shape index: {}]
  %s7 = inlined_call_operand.vmem [shape: f32[1,16], index: 7, kind: input, shape index: {}]
  %s8 = inlined_call_operand.hbm [shape: f32[2,16,16,16], index: 8, kind: output, shape index: {}]
  %s9 = sld [smem:[#allocation0]]
  $region65: #{tpu_custom_call.1} parent=0
    _
  %s11 = ssub.s32 1, %s9
  %s12 = scalar_select 0, %s11, %s9
  $region1: #{tpu_custom_call.1} parent=0
    #allocation3 [shape = 'u8[262144]{0}', space=vmem, size = 0x40000, scoped, tag = 'output window, operand 0']
    #allocation4 [shape = 's32[2]{0}', space=sflag, size = 0x8, scoped, tag = 'scoped memory for tpu_custom_call.1']
    %13 = vsyncpa [#allocation4], 0
    %s14 = scalar_lea.sflag [#allocation4], 1
    %15 = vsyncpa %s14, 0
    loop: start=0, step=1, limit=4
    $region2: #{tpu_custom_call.1} parent=1 // loop_pre_header
      _
    $region3: #{tpu_custom_call.1} parent=1 // loop_header
      %s17 = sphi 0, %s21
      %p18 = scmp.ge.s32.totalorder %s17, 4
      %s27 = sphi 0, %s29
      %s30 = sphi 0, %s27
      %s31 = sphi 0, %s30
      %s47 = sphi 0, %s31
      %s51 = sphi 0, %s51
      %s53 = sphi 0, %s51
      %s54 = sphi 0, %s53
      %s68 = sphi 0, %s54
      %s72 = sphi 0, %s72
      %s74 = sphi 0, %s72
      %s75 = sphi 0, %s74
      %s89 = sphi 0, %s75
      %s93 = sphi 0, %s93
      %s95 = sphi 0, %s93
      %s96 = sphi 0, %s95
      %s110 = sphi 0, %s96
      %s114 = sphi 0, %s114
      %s116 = sphi 0, %s114
      %s117 = sphi 0, %s116
      %s131 = sphi 0, %s117
      %s135 = sphi 0, %s135
      %s137 = sphi 0, %s135
      %s138 = sphi 0, %s137
      %s152 = sphi 0, %s138
      %s156 = sphi 0, %s156
      %s158 = sphi 0, %s156
      %s159 = sphi 0, %s158
      %s173 = sphi 0, %s159
      %s177 = sphi 0, %s177
      %s179 = sphi 0, %s177
      %s180 = sphi 0, %s179
      %s194 = sphi 0, %s180
      %s200 = sphi 0, %s202
      %s203 = sphi 0, %s200
      %s204 = sphi 0, %s203
      %s220 = sphi 0, %s204
    $region4: #{tpu_custom_call.1} parent=1 // loop_header_branch
      %20 = sbr.rel (%p18) target = $region8
    $region5: #{tpu_custom_call.1} parent=1 // loop_body
      %s22 = ssub.s32 %s17, 1
      %s23 = ssub.s32 %s17, 2
      %s24 = sadd.s32 %s17, 1
      %s25 = ssub.s32 %s17, %s24
      %p26 = scmp.eq.s32.totalorder %s25, 0
      %s28 = sadd.s32 %s27, 1
      %s29 = scalar_select %p26, %s27, %s28
      %p32 = pneg %p26
      %p33 = scmp.eq.s32.totalorder %s17, 1
      %p34 = por %p32, %p33
      %p35 = scmp.ne.s32.totalorder %s27, %s30
      %p36 = scmp.eq.s32.totalorder %s17, 0
      %p37 = por %p35, %p36
      %p38 = scmp.ne.s32.totalorder %s27, %s30
      %p39 = scmp.eq.s32.totalorder %s22, 1
      %p40 = por %p38, %p39
      %p41 = scmp.ne.s32.totalorder %s30, %s31
      %p42 = scmp.eq.s32.totalorder %s22, 0
      %p43 = por %p41, %p42
      %p44 = scmp.ne.s32.totalorder %s30, %s31
      %p45 = scmp.eq.s32.totalorder %s23, 1
      %p46 = por %p44, %p45
      %p48 = scmp.ne.s32.totalorder %s31, %s47
      %p49 = scmp.eq.s32.totalorder %s23, 0
      %p50 = por %p48, %p49
      %s52 = sadd.s32 %s51, 1
      %p55 = scmp.eq.s32.totalorder %s17, 1
      %p56 = scmp.ne.s32.totalorder %s51, %s53
      %p57 = scmp.eq.s32.totalorder %s17, 0
      %p58 = por %p56, %p57
      %p59 = scmp.ne.s32.totalorder %s51, %s53
      %p60 = scmp.eq.s32.totalorder %s22, 1
      %p61 = por %p59, %p60
      %p62 = scmp.ne.s32.totalorder %s53, %s54
      %p63 = scmp.eq.s32.totalorder %s22, 0
      %p64 = por %p62, %p63
      %p65 = scmp.ne.s32.totalorder %s53, %s54
      %p66 = scmp.eq.s32.totalorder %s23, 1
      %p67 = por %p65, %p66
      %p69 = scmp.ne.s32.totalorder %s54, %s68
      %p70 = scmp.eq.s32.totalorder %s23, 0
      %p71 = por %p69, %p70
      %s73 = sadd.s32 %s72, 1
      %p76 = scmp.eq.s32.totalorder %s17, 1
      %p77 = scmp.ne.s32.totalorder %s72, %s74
      %p78 = scmp.eq.s32.totalorder %s17, 0
      %p79 = por %p77, %p78
      %p80 = scmp.ne.s32.totalorder %s72, %s74
      %p81 = scmp.eq.s32.totalorder %s22, 1
      %p82 = por %p80, %p81
      %p83 = scmp.ne.s32.totalorder %s74, %s75
      %p84 = scmp.eq.s32.totalorder %s22, 0
      %p85 = por %p83, %p84
      %p86 = scmp.ne.s32.totalorder %s74, %s75
      %p87 = scmp.eq.s32.totalorder %s23, 1
      %p88 = por %p86, %p87
      %p90 = scmp.ne.s32.totalorder %s75, %s89
      %p91 = scmp.eq.s32.totalorder %s23, 0
      %p92 = por %p90, %p91
      %s94 = sadd.s32 %s93, 1
      %p97 = scmp.eq.s32.totalorder %s17, 1
      %p98 = scmp.ne.s32.totalorder %s93, %s95
      %p99 = scmp.eq.s32.totalorder %s17, 0
      %p100 = por %p98, %p99
      %p101 = scmp.ne.s32.totalorder %s93, %s95
      %p102 = scmp.eq.s32.totalorder %s22, 1
      %p103 = por %p101, %p102
      %p104 = scmp.ne.s32.totalorder %s95, %s96
      %p105 = scmp.eq.s32.totalorder %s22, 0
      %p106 = por %p104, %p105
      %p107 = scmp.ne.s32.totalorder %s95, %s96
      %p108 = scmp.eq.s32.totalorder %s23, 1
      %p109 = por %p107, %p108
      %p111 = scmp.ne.s32.totalorder %s96, %s110
      %p112 = scmp.eq.s32.totalorder %s23, 0
      %p113 = por %p111, %p112
      %s115 = sadd.s32 %s114, 1
      %p118 = scmp.eq.s32.totalorder %s17, 1
      %p119 = scmp.ne.s32.totalorder %s114, %s116
      %p120 = scmp.eq.s32.totalorder %s17, 0
      %p121 = por %p119, %p120
      %p122 = scmp.ne.s32.totalorder %s114, %s116
      %p123 = scmp.eq.s32.totalorder %s22, 1
      %p124 = por %p122, %p123
      %p125 = scmp.ne.s32.totalorder %s116, %s117
      %p126 = scmp.eq.s32.totalorder %s22, 0
      %p127 = por %p125, %p126
      %p128 = scmp.ne.s32.totalorder %s116, %s117
      %p129 = scmp.eq.s32.totalorder %s23, 1
      %p130 = por %p128, %p129
      %p132 = scmp.ne.s32.totalorder %s117, %s131
      %p133 = scmp.eq.s32.totalorder %s23, 0
      %p134 = por %p132, %p133
      %s136 = sadd.s32 %s135, 1
      %p139 = scmp.eq.s32.totalorder %s17, 1
      %p140 = scmp.ne.s32.totalorder %s135, %s137
      %p141 = scmp.eq.s32.totalorder %s17, 0
      %p142 = por %p140, %p141
      %p143 = scmp.ne.s32.totalorder %s135, %s137
      %p144 = scmp.eq.s32.totalorder %s22, 1
      %p145 = por %p143, %p144
      %p146 = scmp.ne.s32.totalorder %s137, %s138
      %p147 = scmp.eq.s32.totalorder %s22, 0
      %p148 = por %p146, %p147
      %p149 = scmp.ne.s32.totalorder %s137, %s138
      %p150 = scmp.eq.s32.totalorder %s23, 1
      %p151 = por %p149, %p150
      %p153 = scmp.ne.s32.totalorder %s138, %s152
      %p154 = scmp.eq.s32.totalorder %s23, 0
      %p155 = por %p153, %p154
      %s157 = sadd.s32 %s156, 1
      %p160 = scmp.eq.s32.totalorder %s17, 1
      %p161 = scmp.ne.s32.totalorder %s156, %s158
      %p162 = scmp.eq.s32.totalorder %s17, 0
      %p163 = por %p161, %p162
      %p164 = scmp.ne.s32.totalorder %s156, %s158
      %p165 = scmp.eq.s32.totalorder %s22, 1
      %p166 = por %p164, %p165
      %p167 = scmp.ne.s32.totalorder %s158, %s159
      %p168 = scmp.eq.s32.totalorder %s22, 0
      %p169 = por %p167, %p168
      %p170 = scmp.ne.s32.totalorder %s158, %s159
      %p171 = scmp.eq.s32.totalorder %s23, 1
      %p172 = por %p170, %p171
      %p174 = scmp.ne.s32.totalorder %s159, %s173
      %p175 = scmp.eq.s32.totalorder %s23, 0
      %p176 = por %p174, %p175
      %s178 = sadd.s32 %s177, 1
      %p181 = scmp.eq.s32.totalorder %s17, 1
      %p182 = scmp.ne.s32.totalorder %s177, %s179
      %p183 = scmp.eq.s32.totalorder %s17, 0
      %p184 = por %p182, %p183
      %p185 = scmp.ne.s32.totalorder %s177, %s179
      %p186 = scmp.eq.s32.totalorder %s22, 1
      %p187 = por %p185, %p186
      %p188 = scmp.ne.s32.totalorder %s179, %s180
      %p189 = scmp.eq.s32.totalorder %s22, 0
      %p190 = por %p188, %p189
      %p191 = scmp.ne.s32.totalorder %s179, %s180
      %p192 = scmp.eq.s32.totalorder %s23, 1
      %p193 = por %p191, %p192
      %p195 = scmp.ne.s32.totalorder %s180, %s194
      %p196 = scmp.eq.s32.totalorder %s23, 0
      %p197 = por %p195, %p196
      %s198 = ssub.s32 %s17, %s24
      %p199 = scmp.eq.s32.totalorder %s198, 0
      %s201 = sadd.s32 %s200, 1
      %s202 = scalar_select %p199, %s200, %s201
      %p205 = pneg %p199
      %p206 = scmp.eq.s32.totalorder %s17, 1
      %p207 = por %p205, %p206
      %p208 = scmp.ne.s32.totalorder %s200, %s203
      %p209 = scmp.eq.s32.totalorder %s17, 0
      %p210 = por %p208, %p209
      %p211 = scmp.ne.s32.totalorder %s200, %s203
      %p212 = scmp.eq.s32.totalorder %s22, 1
      %p213 = por %p211, %p212
      %p214 = scmp.ne.s32.totalorder %s203, %s204
      %p215 = scmp.eq.s32.totalorder %s22, 0
      %p216 = por %p214, %p215
      %p217 = scmp.ne.s32.totalorder %s203, %s204
      %p218 = scmp.eq.s32.totalorder %s23, 1
      %p219 = por %p217, %p218
      %p221 = scmp.ne.s32.totalorder %s204, %s220
      %p222 = scmp.eq.s32.totalorder %s23, 0
      %p223 = por %p221, %p222
      %p224 = scmp.le.s32.totalorder 1, %s17
      %p225 = scmp.lt.s32.totalorder %s17, 3
      %p226 = pnand %p224, %p225
      %p227 = pneg %p226
      // Predicated region
      $region9: #{tpu_custom_call.1} parent=5 // pred_check
        _
      $region10: #{tpu_custom_call.1} parent=5 // pred_check_branch
        %229 = sbr.rel (%p226) target = $region12
      $region11: #{tpu_custom_call.1} parent=5 // pred_region
        %s230 = ssub.s32 %s17, 1
        // Predicated region
        $region13: #{tpu_custom_call.1} parent=11 // pred_check
          %p231 = pneg %p64
        $region14: #{tpu_custom_call.1} parent=11 // pred_check_branch
          %233 = sbr.rel (%p231) target = $region16
        $region15: #{tpu_custom_call.1} parent=11 // pred_region
          _
        $region16: #{tpu_custom_call.1} parent=11 // pred_fallthru
          _
        // Predicated region
        $region17: #{tpu_custom_call.1} parent=11 // pred_check
          %p234 = pneg %p85
        $region18: #{tpu_custom_call.1} parent=11 // pred_check_branch
          %236 = sbr.rel (%p234) target = $region20
        $region19: #{tpu_custom_call.1} parent=11 // pred_region
          _
        $region20: #{tpu_custom_call.1} parent=11 // pred_fallthru
          _
        // Predicated region
        $region21: #{tpu_custom_call.1} parent=11 // pred_check
          %p237 = pneg %p106
        $region22: #{tpu_custom_call.1} parent=11 // pred_check_branch
          %239 = sbr.rel (%p237) target = $region24
        $region23: #{tpu_custom_call.1} parent=11 // pred_region
          _
        $region24: #{tpu_custom_call.1} parent=11 // pred_fallthru
          _
        // Predicated region
        $region25: #{tpu_custom_call.1} parent=11 // pred_check
          %p240 = pneg %p127
        $region26: #{tpu_custom_call.1} parent=11 // pred_check_branch
          %242 = sbr.rel (%p240) target = $region28
        $region27: #{tpu_custom_call.1} parent=11 // pred_region
          _
        $region28: #{tpu_custom_call.1} parent=11 // pred_fallthru
          _
        // Predicated region
        $region29: #{tpu_custom_call.1} parent=11 // pred_check
          %p243 = pneg %p148
        $region30: #{tpu_custom_call.1} parent=11 // pred_check_branch
          %245 = sbr.rel (%p243) target = $region32
        $region31: #{tpu_custom_call.1} parent=11 // pred_region
          _
        $region32: #{tpu_custom_call.1} parent=11 // pred_fallthru
          _
        // Predicated region
        $region33: #{tpu_custom_call.1} parent=11 // pred_check
          %p246 = pneg %p169
        $region34: #{tpu_custom_call.1} parent=11 // pred_check_branch
          %248 = sbr.rel (%p246) target = $region36
        $region35: #{tpu_custom_call.1} parent=11 // pred_region
          _
        $region36: #{tpu_custom_call.1} parent=11 // pred_fallthru
          _
        // Predicated region
        $region37: #{tpu_custom_call.1} parent=11 // pred_check
          %p249 = pneg %p190
        $region38: #{tpu_custom_call.1} parent=11 // pred_check_branch
          %251 = sbr.rel (%p249) target = $region40
        $region39: #{tpu_custom_call.1} parent=11 // pred_region
          _
        $region40: #{tpu_custom_call.1} parent=11 // pred_fallthru
          _
      $region12: #{tpu_custom_call.1} parent=5 // pred_fallthru
        _
      %p252 = scmp.lt.s32.totalorder %s17, 2
      // Predicated region
      $region41: #{tpu_custom_call.1} parent=5 // pred_check
        %p253 = pneg %p252
      $region42: #{tpu_custom_call.1} parent=5 // pred_check_branch
        %255 = sbr.rel (%p253) target = $region44
      $region43: #{tpu_custom_call.1} parent=5 // pred_region
        // Predicated region
        $region45: #{tpu_custom_call.1} parent=43 // pred_check
          %p256 = pneg %p37
        $region46: #{tpu_custom_call.1} parent=43 // pred_check_branch
          %258 = sbr.rel (%p256) target = $region48
        $region47: #{tpu_custom_call.1} parent=43 // pred_region
          %p259 = scmp.lt.s32.totalorder %s17, 1
          %s260 = scalar_select %p259, %s17, 1
          %s261 = smul.addr %s260, 32
          %s262 = smul.addr %s261, 4
          %s263 = scalar_lea.vmem %s0, %s262
        $region48: #{tpu_custom_call.1} parent=43 // pred_fallthru
          _
      $region44: #{tpu_custom_call.1} parent=5 // pred_fallthru
        _
      %p264 = scmp.le.s32.totalorder 1, %s17
      %p265 = scmp.lt.s32.totalorder %s17, 3
      %p266 = pnand %p264, %p265
      %p267 = pneg %p266
      // Predicated region
      $region49: #{tpu_custom_call.1} parent=5 // pred_check
        _
      $region50: #{tpu_custom_call.1} parent=5 // pred_check_branch
        %269 = sbr.rel (%p266) target = $region52
      $region51: #{tpu_custom_call.1} parent=5 // pred_region
        %s270 = ssub.s32 %s17, 1
        %p271 = scmp.lt.s32.totalorder %s22, 1
        %s272 = scalar_select %p271, %s22, 1
        %s273 = smul.addr %s272, 32
        %s274 = smul.addr %s273, 4
        %s275 = scalar_lea.vmem %s0, %s274
        %p276 = pneg %p43
        %p277 = pneg %p40
        %p278 = pneg %p64
        %p279 = pneg %p61
        %p280 = pneg %p85
        %p281 = pneg %p82
        %p282 = pneg %p106
        %p283 = pneg %p103
        %p284 = pneg %p127
        %p285 = pneg %p124
        %p286 = pneg %p148
        %p287 = pneg %p145
        %p288 = pneg %p169
        %p289 = pneg %p166
        %p290 = pneg %p190
        %p291 = pneg %p187
        %p292 = pneg %p216
        %p293 = pneg %p213
        %s294 = sand.u32 %s203, 1
        %s295 = scalar_lea.sflag [#allocation4], %s294
        %s296 = sand.u32 %s203, 1
        %s297 = smul.addr %s296, 256
        %s298 = scalar_lea.vmem [#allocation3], %s297
        %p299 = scmp.lt.s32.totalorder %s22, 1
        %s300 = scalar_select %p299, %s22, 1
        %s301 = smul.addr %s300, 32
        %s302 = smul.addr %s301, 4
        %s303 = scalar_lea.vmem %s0, %s302
        %v305 = vld [vmem:[%s303] sm:$0xf]
        %v306 = vld [vmem:[%s303 + $0x4] sm:$0xf]
        %v307 = vld [vmem:[%s303 + $0x8] sm:$0xf]
        %v308 = vld [vmem:[%s303 + $0xc] sm:$0xf]
        %v309 = vld [vmem:[%s303 + $0x10] sm:$0xf]
        %v310 = vld [vmem:[%s303 + $0x14] sm:$0xf]
        %v311 = vld [vmem:[%s303 + $0x18] sm:$0xf]
        %v312 = vld [vmem:[%s303 + $0x1c] sm:$0xf]
        %v313 = vld [vmem:[%s303 + $0x20] sm:$0xf]
        %v314 = vld [vmem:[%s303 + $0x24] sm:$0xf]
        %v315 = vld [vmem:[%s303 + $0x28] sm:$0xf]
        %v316 = vld [vmem:[%s303 + $0x2c] sm:$0xf]
        %v317 = vld [vmem:[%s303 + $0x30] sm:$0xf]
        %v318 = vld [vmem:[%s303 + $0x34] sm:$0xf]
        %v319 = vld [vmem:[%s303 + $0x38] sm:$0xf]
        %v320 = vld [vmem:[%s303 + $0x3c] sm:$0xf]
        %v321 = vld [vmem:[%s303 + $0x40] sm:$0xf]
        %v322 = vld [vmem:[%s303 + $0x44] sm:$0xf]
        %v323 = vld [vmem:[%s303 + $0x48] sm:$0xf]
        %v324 = vld [vmem:[%s303 + $0x4c] sm:$0xf]
        %v325 = vld [vmem:[%s303 + $0x50] sm:$0xf]
        %v326 = vld [vmem:[%s303 + $0x54] sm:$0xf]
        %v327 = vld [vmem:[%s303 + $0x58] sm:$0xf]
        %v328 = vld [vmem:[%s303 + $0x5c] sm:$0xf]
        %v329 = vld [vmem:[%s303 + $0x60] sm:$0xf]
        %v330 = vld [vmem:[%s303 + $0x64] sm:$0xf]
        %v331 = vld [vmem:[%s303 + $0x68] sm:$0xf]
        %v332 = vld [vmem:[%s303 + $0x6c] sm:$0xf]
        %v333 = vld [vmem:[%s303 + $0x70] sm:$0xf]
        %v334 = vld [vmem:[%s303 + $0x74] sm:$0xf]
        %v335 = vld [vmem:[%s303 + $0x78] sm:$0xf]
        %v336 = vld [vmem:[%s303 + $0x7c] sm:$0xf]
        %v337 = vld [vmem:[%s1] sm:$0x3]
        %v338 = vld [vmem:[%s5] sm:$0x1]
        %v340 = vperm.slane %v338, 0
        %v374 = vunpack.c.l.b16 %v305
        %v375 = vunpack.c.l.b16 %v306
        %v376 = vunpack.c.l.b16 %v307
        %v377 = vunpack.c.l.b16 %v308
        %v378 = vunpack.c.l.b16 %v309
        %v379 = vunpack.c.l.b16 %v310
        %v380 = vunpack.c.l.b16 %v311
        %v381 = vunpack.c.l.b16 %v312
        %v382 = vunpack.c.l.b16 %v313
        %v383 = vunpack.c.l.b16 %v314
        %v384 = vunpack.c.l.b16 %v315
        %v385 = vunpack.c.l.b16 %v316
        %v386 = vunpack.c.l.b16 %v317
        %v387 = vunpack.c.l.b16 %v318
        %v388 = vunpack.c.l.b16 %v319
        %v389 = vunpack.c.l.b16 %v320
        %v390 = vunpack.c.l.b16 %v321
        %v391 = vunpack.c.l.b16 %v322
        %v392 = vunpack.c.l.b16 %v323
        %v393 = vunpack.c.l.b16 %v324
        %v394 = vunpack.c.l.b16 %v325
        %v395 = vunpack.c.l.b16 %v326
        %v396 = vunpack.c.l.b16 %v327
        %v397 = vunpack.c.l.b16 %v328
        %v398 = vunpack.c.l.b16 %v329
        %v399 = vunpack.c.l.b16 %v330
        %v400 = vunpack.c.l.b16 %v331
        %v401 = vunpack.c.l.b16 %v332
        %v402 = vunpack.c.l.b16 %v333
        %v403 = vunpack.c.l.b16 %v334
        %v404 = vunpack.c.l.b16 %v335
        %v405 = vunpack.c.l.b16 %v336
        %v406 = vpack.c.b16 %v375, %v374
        %v407 = vpack.c.b16 %v377, %v376
        %v408 = vpack.c.b16 %v379, %v378
        %v409 = vpack.c.b16 %v381, %v380
        %v410 = vpack.c.b16 %v383, %v382
        %v411 = vpack.c.b16 %v385, %v384
        %v412 = vpack.c.b16 %v387, %v386
        %v413 = vpack.c.b16 %v389, %v388
        %v414 = vpack.c.b16 %v391, %v390
        %v415 = vpack.c.b16 %v393, %v392
        %v416 = vpack.c.b16 %v395, %v394
        %v417 = vpack.c.b16 %v397, %v396
        %v418 = vpack.c.b16 %v399, %v398
        %v419 = vpack.c.b16 %v401, %v400
        %v420 = vpack.c.b16 %v403, %v402
        %v421 = vpack.c.b16 %v405, %v404
        %vm422 = vcmask 31744
        %v424 = vsel %vm422, %v406, 0
        %v427 = vsel %vm422, %v407, 0
        %v430 = vsel %vm422, %v408, 0
        %v433 = vsel %vm422, %v409, 0
        %v436 = vsel %vm422, %v410, 0
        %v439 = vsel %vm422, %v411, 0
        %v442 = vsel %vm422, %v412, 0
        %v445 = vsel %vm422, %v413, 0
        %v448 = vsel %vm422, %v414, 0
        %v451 = vsel %vm422, %v415, 0
        %v454 = vsel %vm422, %v416, 0
        %v457 = vsel %vm422, %v417, 0
        %v460 = vsel %vm422, %v418, 0
        %v463 = vsel %vm422, %v419, 0
        %v466 = vsel %vm422, %v420, 0
        %v469 = vsel %vm422, %v421, 0
        %vm471 = vcmask 1041408
        %v473 = vsel %vm471, %v337, 0
        %475 = vmatpush.bf16.msra.mxu0 0
        %476 = vmatpush.bf16.msra.mxu0 0
        %477 = vmatpush.bf16.msra.mxu0 0
        %478 = vmatpush.bf16.msra.mxu0 0
        %479 = vmatpush.bf16.msra.mxu0 0
        %480 = vmatpush.bf16.msra.mxu0 0
        %481 = vmatpush.bf16.msra.mxu0 0
        %482 = vmatpush.bf16.msra.mxu0 %v473
        %483 = vmatmul.bf16.gmra.mxu0 %v424
        %v484 = vpop.f32.mrf.mxu0
        %v485 = vadd.f32 %v340, %v484
        %v486 = vpop.f32.mrf.mxu0
        %v487 = vadd.f32 %v340, %v486
        %488 = vmatmul.bf16.gmra.mxu0 %v427
        %v489 = vpop.f32.mrf.mxu0
        %v490 = vadd.f32 %v340, %v489
        %v491 = vpop.f32.mrf.mxu0
        %v492 = vadd.f32 %v340, %v491
        %493 = vmatmul.bf16.gmra.mxu0 %v430
        %v494 = vpop.f32.mrf.mxu0
        %v495 = vadd.f32 %v340, %v494
        %v496 = vpop.f32.mrf.mxu0
        %v497 = vadd.f32 %v340, %v496
        %498 = vmatmul.bf16.gmra.mxu0 %v433
        %v499 = vpop.f32.mrf.mxu0
        %v500 = vadd.f32 %v340, %v499
        %v501 = vpop.f32.mrf.mxu0
        %v502 = vadd.f32 %v340, %v501
        %503 = vmatmul.bf16.gmra.mxu0 %v436
        %v504 = vpop.f32.mrf.mxu0
        %v505 = vadd.f32 %v340, %v504
        %v506 = vpop.f32.mrf.mxu0
        %v507 = vadd.f32 %v340, %v506
        %508 = vmatmul.bf16.gmra.mxu0 %v439
        %v509 = vpop.f32.mrf.mxu0
        %v510 = vadd.f32 %v340, %v509
        %v511 = vpop.f32.mrf.mxu0
        %v512 = vadd.f32 %v340, %v511
        %513 = vmatmul.bf16.gmra.mxu0 %v442
        %v514 = vpop.f32.mrf.mxu0
        %v515 = vadd.f32 %v340, %v514
        %v516 = vpop.f32.mrf.mxu0
        %v517 = vadd.f32 %v340, %v516
        %518 = vmatmul.bf16.gmra.mxu0 %v445
        %v519 = vpop.f32.mrf.mxu0
        %v520 = vadd.f32 %v340, %v519
        %v521 = vpop.f32.mrf.mxu0
        %v522 = vadd.f32 %v340, %v521
        %523 = vmatmul.bf16.gmra.mxu0 %v448
        %v524 = vpop.f32.mrf.mxu0
        %v525 = vadd.f32 %v340, %v524
        %v526 = vpop.f32.mrf.mxu0
        %v527 = vadd.f32 %v340, %v526
        %528 = vmatmul.bf16.gmra.mxu0 %v451
        %v529 = vpop.f32.mrf.mxu0
        %v530 = vadd.f32 %v340, %v529
        %v531 = vpop.f32.mrf.mxu0
        %v532 = vadd.f32 %v340, %v531
        %533 = vmatmul.bf16.gmra.mxu0 %v454
        %v534 = vpop.f32.mrf.mxu0
        %v535 = vadd.f32 %v340, %v534
        %v536 = vpop.f32.mrf.mxu0
        %v537 = vadd.f32 %v340, %v536
        %538 = vmatmul.bf16.gmra.mxu0 %v457
        %v539 = vpop.f32.mrf.mxu0
        %v540 = vadd.f32 %v340, %v539
        %v541 = vpop.f32.mrf.mxu0
        %v542 = vadd.f32 %v340, %v541
        %543 = vmatmul.bf16.gmra.mxu0 %v460
        %v544 = vpop.f32.mrf.mxu0
        %v545 = vadd.f32 %v340, %v544
        %v546 = vpop.f32.mrf.mxu0
        %v547 = vadd.f32 %v340, %v546
        %548 = vmatmul.bf16.gmra.mxu0 %v463
        %v549 = vpop.f32.mrf.mxu0
        %v550 = vadd.f32 %v340, %v549
        %v551 = vpop.f32.mrf.mxu0
        %v552 = vadd.f32 %v340, %v551
        %553 = vmatmul.bf16.gmra.mxu0 %v466
        %v554 = vpop.f32.mrf.mxu0
        %v555 = vadd.f32 %v340, %v554
        %v556 = vpop.f32.mrf.mxu0
        %v557 = vadd.f32 %v340, %v556
        %558 = vmatmul.bf16.gmra.mxu0 %v469
        %v559 = vpop.f32.mrf.mxu0
        %v560 = vadd.f32 %v340, %v559
        %v561 = vpop.f32.mrf.mxu0
        %v562 = vadd.f32 %v340, %v561
        %563 = vdwg.mxu0
        %v564 = vmax.f32 %v485, 0.0
        %v565 = vmax.f32 %v487, 0.0
        %v566 = vmax.f32 %v490, 0.0
        %v567 = vmax.f32 %v492, 0.0
        %v568 = vmax.f32 %v495, 0.0
        %v569 = vmax.f32 %v497, 0.0
        %v570 = vmax.f32 %v500, 0.0
        %v571 = vmax.f32 %v502, 0.0
        %v572 = vmax.f32 %v505, 0.0
        %v573 = vmax.f32 %v507, 0.0
        %v574 = vmax.f32 %v510, 0.0
        %v575 = vmax.f32 %v512, 0.0
        %v576 = vmax.f32 %v515, 0.0
        %v577 = vmax.f32 %v517, 0.0
        %v578 = vmax.f32 %v520, 0.0
        %v579 = vmax.f32 %v522, 0.0
        %v580 = vmax.f32 %v525, 0.0
        %v581 = vmax.f32 %v527, 0.0
        %v582 = vmax.f32 %v530, 0.0
        %v583 = vmax.f32 %v532, 0.0
        %v584 = vmax.f32 %v535, 0.0
        %v585 = vmax.f32 %v537, 0.0
        %v586 = vmax.f32 %v540, 0.0
        %v587 = vmax.f32 %v542, 0.0
        %v588 = vmax.f32 %v545, 0.0
        %v589 = vmax.f32 %v547, 0.0
        %v590 = vmax.f32 %v550, 0.0
        %v591 = vmax.f32 %v552, 0.0
        %v592 = vmax.f32 %v555, 0.0
        %v593 = vmax.f32 %v557, 0.0
        %v594 = vmax.f32 %v560, 0.0
        %v595 = vmax.f32 %v562, 0.0
        %596 = vst.msk [vmem:[#allocation2] sm:$0xff] %vm422, 0.0
        %597 = vst.msk [vmem:[#allocation2 + $0x8] sm:$0xff] %vm422, 0.0
        %vm598 = vcmask 25600
        %599 = vst.msk [vmem:[#allocation2 + $0x10] sm:$0x3] %vm598, 0.0
        %s600 = scalar_lea.vmem [#allocation2], 408
        %601 = vst.msk [vmem:[%s600] sm:$0xff] %vm422, 0.0
        %602 = vst.msk [vmem:[%s600 + $0x8] sm:$0xff] %vm422, 0.0
        %603 = vst.msk [vmem:[%s600 + $0x10] sm:$0x3] %vm598, 0.0
        %vm604 = vcmask 24576
        %605 = vst.msk [vmem:[#allocation2] sm:$0x1] %vm604, 0.0
        %606 = vst.msk [vmem:[#allocation2 + $0x18] sm:$0x1] %vm604, 0.0
        %607 = vst.msk [vmem:[#allocation2 + $0x30] sm:$0x1] %vm604, 0.0
        %608 = vst.msk [vmem:[#allocation2 + $0x48] sm:$0x1] %vm604, 0.0
        %609 = vst.msk [vmem:[#allocation2 + $0x60] sm:$0x1] %vm604, 0.0
        %610 = vst.msk [vmem:[#allocation2 + $0x78] sm:$0x1] %vm604, 0.0
        %611 = vst.msk [vmem:[#allocation2 + $0x90] sm:$0x1] %vm604, 0.0
        %612 = vst.msk [vmem:[#allocation2 + $0xa8] sm:$0x1] %vm604, 0.0
        %613 = vst.msk [vmem:[#allocation2 + $0xc0] sm:$0x1] %vm604, 0.0
        %614 = vst.msk [vmem:[#allocation2 + $0xd8] sm:$0x1] %vm604, 0.0
        %615 = vst.msk [vmem:[#allocation2 + $0xf0] sm:$0x1] %vm604, 0.0
        %616 = vst.msk [vmem:[#allocation2 + $0x108] sm:$0x1] %vm604, 0.0
        %617 = vst.msk [vmem:[#allocation2 + $0x120] sm:$0x1] %vm604, 0.0
        %618 = vst.msk [vmem:[#allocation2 + $0x138] sm:$0x1] %vm604, 0.0
        %619 = vst.msk [vmem:[#allocation2 + $0x150] sm:$0x1] %vm604, 0.0
        %620 = vst.msk [vmem:[#allocation2 + $0x168] sm:$0x1] %vm604, 0.0
        %621 = vst.msk [vmem:[#allocation2 + $0x180] sm:$0x1] %vm604, 0.0
        %622 = vst.msk [vmem:[#allocation2 + $0x198] sm:$0x1] %vm604, 0.0
        %623 = vst.msk [vmem:[#allocation2 + $0x11] sm:$0x1] %vm604, 0.0
        %624 = vst.msk [vmem:[#allocation2 + $0x29] sm:$0x1] %vm604, 0.0
        %625 = vst.msk [vmem:[#allocation2 + $0x41] sm:$0x1] %vm604, 0.0
        %626 = vst.msk [vmem:[#allocation2 + $0x59] sm:$0x1] %vm604, 0.0
        %627 = vst.msk [vmem:[#allocation2 + $0x71] sm:$0x1] %vm604, 0.0
        %628 = vst.msk [vmem:[#allocation2 + $0x89] sm:$0x1] %vm604, 0.0
        %629 = vst.msk [vmem:[#allocation2 + $0xa1] sm:$0x1] %vm604, 0.0
        %630 = vst.msk [vmem:[#allocation2 + $0xb9] sm:$0x1] %vm604, 0.0
        %631 = vst.msk [vmem:[#allocation2 + $0xd1] sm:$0x1] %vm604, 0.0
        %632 = vst.msk [vmem:[#allocation2 + $0xe9] sm:$0x1] %vm604, 0.0
        %633 = vst.msk [vmem:[#allocation2 + $0x101] sm:$0x1] %vm604, 0.0
        %634 = vst.msk [vmem:[#allocation2 + $0x119] sm:$0x1] %vm604, 0.0
        %635 = vst.msk [vmem:[#allocation2 + $0x131] sm:$0x1] %vm604, 0.0
        %636 = vst.msk [vmem:[#allocation2 + $0x149] sm:$0x1] %vm604, 0.0
        %637 = vst.msk [vmem:[#allocation2 + $0x161] sm:$0x1] %vm604, 0.0
        %638 = vst.msk [vmem:[#allocation2 + $0x179] sm:$0x1] %vm604, 0.0
        %639 = vst.msk [vmem:[#allocation2 + $0x191] sm:$0x1] %vm604, 0.0
        %640 = vst.msk [vmem:[#allocation2 + $0x1a9] sm:$0x1] %vm604, 0.0
        %s641 = scalar_lea.vmem [#allocation2], 24
        %642 = vst.msk [vmem:[%s641 + $0x1] sm:$0xff] %vm422, %v564
        %643 = vst.msk [vmem:[%s641 + $0x9] sm:$0xff] %vm422, %v565
        %644 = vst.msk [vmem:[%s641 + $0x19] sm:$0xff] %vm422, %v566
        %645 = vst.msk [vmem:[%s641 + $0x21] sm:$0xff] %vm422, %v567
        %646 = vst.msk [vmem:[%s641 + $0x31] sm:$0xff] %vm422, %v568
        %647 = vst.msk [vmem:[%s641 + $0x39] sm:$0xff] %vm422, %v569
        %648 = vst.msk [vmem:[%s641 + $0x49] sm:$0xff] %vm422, %v570
        %649 = vst.msk [vmem:[%s641 + $0x51] sm:$0xff] %vm422, %v571
        %650 = vst.msk [vmem:[%s641 + $0x61] sm:$0xff] %vm422, %v572
        %651 = vst.msk [vmem:[%s641 + $0x69] sm:$0xff] %vm422, %v573
        %652 = vst.msk [vmem:[%s641 + $0x79] sm:$0xff] %vm422, %v574
        %653 = vst.msk [vmem:[%s641 + $0x81] sm:$0xff] %vm422, %v575
        %654 = vst.msk [vmem:[%s641 + $0x91] sm:$0xff] %vm422, %v576
        %655 = vst.msk [vmem:[%s641 + $0x99] sm:$0xff] %vm422, %v577
        %656 = vst.msk [vmem:[%s641 + $0xa9] sm:$0xff] %vm422, %v578
        %657 = vst.msk [vmem:[%s641 + $0xb1] sm:$0xff] %vm422, %v579
        %658 = vst.msk [vmem:[%s641 + $0xc1] sm:$0xff] %vm422, %v580
        %659 = vst.msk [vmem:[%s641 + $0xc9] sm:$0xff] %vm422, %v581
        %660 = vst.msk [vmem:[%s641 + $0xd9] sm:$0xff] %vm422, %v582
        %661 = vst.msk [vmem:[%s641 + $0xe1] sm:$0xff] %vm422, %v583
        %662 = vst.msk [vmem:[%s641 + $0xf1] sm:$0xff] %vm422, %v584
        %663 = vst.msk [vmem:[%s641 + $0xf9] sm:$0xff] %vm422, %v585
        %664 = vst.msk [vmem:[%s641 + $0x109] sm:$0xff] %vm422, %v586
        %665 = vst.msk [vmem:[%s641 + $0x111] sm:$0xff] %vm422, %v587
        %666 = vst.msk [vmem:[%s641 + $0x121] sm:$0xff] %vm422, %v588
        %667 = vst.msk [vmem:[%s641 + $0x129] sm:$0xff] %vm422, %v589
        %668 = vst.msk [vmem:[%s641 + $0x139] sm:$0xff] %vm422, %v590
        %669 = vst.msk [vmem:[%s641 + $0x141] sm:$0xff] %vm422, %v591
        %670 = vst.msk [vmem:[%s641 + $0x151] sm:$0xff] %vm422, %v592
        %671 = vst.msk [vmem:[%s641 + $0x159] sm:$0xff] %vm422, %v593
        %672 = vst.msk [vmem:[%s641 + $0x169] sm:$0xff] %vm422, %v594
        %673 = vst.msk [vmem:[%s641 + $0x171] sm:$0xff] %vm422, %v595
        %v674 = vld [vmem:[#allocation2] sm:$0xff]
        %v675 = vld [vmem:[#allocation2 + $0x8] sm:$0xff]
        %v676 = vld [vmem:[#allocation2 + $0x10] sm:$0x3]
        %v677 = vld [vmem:[#allocation2 + $0x18] sm:$0xff]
        %v678 = vld [vmem:[#allocation2 + $0x20] sm:$0xff]
        %v679 = vld [vmem:[#allocation2 + $0x28] sm:$0x3]
        %v680 = vld [vmem:[#allocation2 + $0x30] sm:$0xff]
        %v681 = vld [vmem:[#allocation2 + $0x38] sm:$0xff]
        %v682 = vld [vmem:[#allocation2 + $0x40] sm:$0x3]
        %v683 = vld [vmem:[#allocation2 + $0x48] sm:$0xff]
        %v684 = vld [vmem:[#allocation2 + $0x50] sm:$0xff]
        %v685 = vld [vmem:[#allocation2 + $0x58] sm:$0x3]
        %v686 = vld [vmem:[#allocation2 + $0x60] sm:$0xff]
        %v687 = vld [vmem:[#allocation2 + $0x68] sm:$0xff]
        %v688 = vld [vmem:[#allocation2 + $0x70] sm:$0x3]
        %v689 = vld [vmem:[#allocation2 + $0x78] sm:$0xff]
        %v690 = vld [vmem:[#allocation2 + $0x80] sm:$0xff]
        %v691 = vld [vmem:[#allocation2 + $0x88] sm:$0x3]
        %v692 = vld [vmem:[#allocation2 + $0x90] sm:$0xff]
        %v693 = vld [vmem:[#allocation2 + $0x98] sm:$0xff]
        %v694 = vld [vmem:[#allocation2 + $0xa0] sm:$0x3]
        %v695 = vld [vmem:[#allocation2 + $0xa8] sm:$0xff]
        %v696 = vld [vmem:[#allocation2 + $0xb0] sm:$0xff]
        %v697 = vld [vmem:[#allocation2 + $0xb8] sm:$0x3]
        %v698 = vld [vmem:[#allocation2 + $0xc0] sm:$0xff]
        %v699 = vld [vmem:[#allocation2 + $0xc8] sm:$0xff]
        %v700 = vld [vmem:[#allocation2 + $0xd0] sm:$0x3]
        %v701 = vld [vmem:[#allocation2 + $0xd8] sm:$0xff]
        %v702 = vld [vmem:[#allocation2 + $0xe0] sm:$0xff]
        %v703 = vld [vmem:[#allocation2 + $0xe8] sm:$0x3]
        %v704 = vld [vmem:[#allocation2 + $0xf0] sm:$0xff]
        %v705 = vld [vmem:[#allocation2 + $0xf8] sm:$0xff]
        %v706 = vld [vmem:[#allocation2 + $0x100] sm:$0x3]
        %v707 = vld [vmem:[#allocation2 + $0x108] sm:$0xff]
        %v708 = vld [vmem:[#allocation2 + $0x110] sm:$0xff]
        %v709 = vld [vmem:[#allocation2 + $0x118] sm:$0x3]
        %v710 = vld [vmem:[#allocation2 + $0x120] sm:$0xff]
        %v711 = vld [vmem:[#allocation2 + $0x128] sm:$0xff]
        %v712 = vld [vmem:[#allocation2 + $0x130] sm:$0x3]
        %v713 = vld [vmem:[#allocation2 + $0x138] sm:$0xff]
        %v714 = vld [vmem:[#allocation2 + $0x140] sm:$0xff]
        %v715 = vld [vmem:[#allocation2 + $0x148] sm:$0x3]
        %v716 = vld [vmem:[#allocation2 + $0x150] sm:$0xff]
        %v717 = vld [vmem:[#allocation2 + $0x158] sm:$0xff]
        %v718 = vld [vmem:[#allocation2 + $0x160] sm:$0x3]
        %v719 = vld [vmem:[#allocation2 + $0x168] sm:$0xff]
        %v720 = vld [vmem:[#allocation2 + $0x170] sm:$0xff]
        %v721 = vld [vmem:[#allocation2 + $0x178] sm:$0x3]
        %v722 = vld [vmem:[#allocation2 + $0x180] sm:$0xff]
        %v723 = vld [vmem:[#allocation2 + $0x188] sm:$0xff]
        %v724 = vld [vmem:[#allocation2 + $0x190] sm:$0x3]
        %v725 = vld [vmem:[#allocation2 + $0x198] sm:$0xff]
        %v726 = vld [vmem:[#allocation2 + $0x1a0] sm:$0xff]
        %v727 = vld [vmem:[#allocation2 + $0x1a8] sm:$0x3]
        %vm776 = vcmask 1046528
        %v777 = vrot.slane %v674, 1
        %v778 = vrot.slane %v675, 1
        %v779 = vsel %vm776, %v777, %v778
        %v780 = vrot.slane %v676, 1
        %v781 = vsel %vm776, %v778, %v780
        %v782 = vrot.slane %v677, 1
        %v783 = vrot.slane %v678, 1
        %v784 = vsel %vm776, %v782, %v783
        %v785 = vrot.slane %v679, 1
        %v786 = vsel %vm776, %v783, %v785
        %v787 = vrot.slane %v680, 1
        %v788 = vrot.slane %v681, 1
        %v789 = vsel %vm776, %v787, %v788
        %v790 = vrot.slane %v682, 1
        %v791 = vsel %vm776, %v788, %v790
        %v792 = vrot.slane %v683, 1
        %v793 = vrot.slane %v684, 1
        %v794 = vsel %vm776, %v792, %v793
        %v795 = vrot.slane %v685, 1
        %v796 = vsel %vm776, %v793, %v795
        %v797 = vrot.slane %v686, 1
        %v798 = vrot.slane %v687, 1
        %v799 = vsel %vm776, %v797, %v798
        %v800 = vrot.slane %v688, 1
        %v801 = vsel %vm776, %v798, %v800
        %v802 = vrot.slane %v689, 1
        %v803 = vrot.slane %v690, 1
        %v804 = vsel %vm776, %v802, %v803
        %v805 = vrot.slane %v691, 1
        %v806 = vsel %vm776, %v803, %v805
        %v807 = vrot.slane %v692, 1
        %v808 = vrot.slane %v693, 1
        %v809 = vsel %vm776, %v807, %v808
        %v810 = vrot.slane %v694, 1
        %v811 = vsel %vm776, %v808, %v810
        %v812 = vrot.slane %v695, 1
        %v813 = vrot.slane %v696, 1
        %v814 = vsel %vm776, %v812, %v813
        %v815 = vrot.slane %v697, 1
        %v816 = vsel %vm776, %v813, %v815
        %v817 = vrot.slane %v698, 1
        %v818 = vrot.slane %v699, 1
        %v819 = vsel %vm776, %v817, %v818
        %v820 = vrot.slane %v700, 1
        %v821 = vsel %vm776, %v818, %v820
        %v822 = vrot.slane %v701, 1
        %v823 = vrot.slane %v702, 1
        %v824 = vsel %vm776, %v822, %v823
        %v825 = vrot.slane %v703, 1
        %v826 = vsel %vm776, %v823, %v825
        %v827 = vrot.slane %v704, 1
        %v828 = vrot.slane %v705, 1
        %v829 = vsel %vm776, %v827, %v828
        %v830 = vrot.slane %v706, 1
        %v831 = vsel %vm776, %v828, %v830
        %v832 = vrot.slane %v707, 1
        %v833 = vrot.slane %v708, 1
        %v834 = vsel %vm776, %v832, %v833
        %v835 = vrot.slane %v709, 1
        %v836 = vsel %vm776, %v833, %v835
        %v837 = vrot.slane %v710, 1
        %v838 = vrot.slane %v711, 1
        %v839 = vsel %vm776, %v837, %v838
        %v840 = vrot.slane %v712, 1
        %v841 = vsel %vm776, %v838, %v840
        %v842 = vrot.slane %v713, 1
        %v843 = vrot.slane %v714, 1
        %v844 = vsel %vm776, %v842, %v843
        %v845 = vrot.slane %v715, 1
        %v846 = vsel %vm776, %v843, %v845
        %v847 = vrot.slane %v716, 1
        %v848 = vrot.slane %v717, 1
        %v849 = vsel %vm776, %v847, %v848
        %v850 = vrot.slane %v718, 1
        %v851 = vsel %vm776, %v848, %v850
        %v852 = vrot.slane %v719, 1
        %v853 = vrot.slane %v720, 1
        %v854 = vsel %vm776, %v852, %v853
        %v855 = vrot.slane %v721, 1
        %v856 = vsel %vm776, %v853, %v855
        %vm857 = vcmask 1045504
        %v858 = vrot.slane %v674, 2
        %v859 = vrot.slane %v675, 2
        %v860 = vsel %vm857, %v858, %v859
        %v861 = vrot.slane %v676, 2
        %v862 = vsel %vm857, %v859, %v861
        %v863 = vrot.slane %v677, 2
        %v864 = vrot.slane %v678, 2
        %v865 = vsel %vm857, %v863, %v864
        %v866 = vrot.slane %v679, 2
        %v867 = vsel %vm857, %v864, %v866
        %v868 = vrot.slane %v680, 2
        %v869 = vrot.slane %v681, 2
        %v870 = vsel %vm857, %v868, %v869
        %v871 = vrot.slane %v682, 2
        %v872 = vsel %vm857, %v869, %v871
        %v873 = vrot.slane %v683, 2
        %v874 = vrot.slane %v684, 2
        %v875 = vsel %vm857, %v873, %v874
        %v876 = vrot.slane %v685, 2
        %v877 = vsel %vm857, %v874, %v876
        %v878 = vrot.slane %v686, 2
        %v879 = vrot.slane %v687, 2
        %v880 = vsel %vm857, %v878, %v879
        %v881 = vrot.slane %v688, 2
        %v882 = vsel %vm857, %v879, %v881
        %v883 = vrot.slane %v689, 2
        %v884 = vrot.slane %v690, 2
        %v885 = vsel %vm857, %v883, %v884
        %v886 = vrot.slane %v691, 2
        %v887 = vsel %vm857, %v884, %v886
        %v888 = vrot.slane %v692, 2
        %v889 = vrot.slane %v693, 2
        %v890 = vsel %vm857, %v888, %v889
        %v891 = vrot.slane %v694, 2
        %v892 = vsel %vm857, %v889, %v891
        %v893 = vrot.slane %v695, 2
        %v894 = vrot.slane %v696, 2
        %v895 = vsel %vm857, %v893, %v894
        %v896 = vrot.slane %v697, 2
        %v897 = vsel %vm857, %v894, %v896
        %v898 = vrot.slane %v698, 2
        %v899 = vrot.slane %v699, 2
        %v900 = vsel %vm857, %v898, %v899
        %v901 = vrot.slane %v700, 2
        %v902 = vsel %vm857, %v899, %v901
        %v903 = vrot.slane %v701, 2
        %v904 = vrot.slane %v702, 2
        %v905 = vsel %vm857, %v903, %v904
        %v906 = vrot.slane %v703, 2
        %v907 = vsel %vm857, %v904, %v906
        %v908 = vrot.slane %v704, 2
        %v909 = vrot.slane %v705, 2
        %v910 = vsel %vm857, %v908, %v909
        %v911 = vrot.slane %v706, 2
        %v912 = vsel %vm857, %v909, %v911
        %v913 = vrot.slane %v707, 2
        %v914 = vrot.slane %v708, 2
        %v915 = vsel %vm857, %v913, %v914
        %v916 = vrot.slane %v709, 2
        %v917 = vsel %vm857, %v914, %v916
        %v918 = vrot.slane %v710, 2
        %v919 = vrot.slane %v711, 2
        %v920 = vsel %vm857, %v918, %v919
        %v921 = vrot.slane %v712, 2
        %v922 = vsel %vm857, %v919, %v921
        %v923 = vrot.slane %v713, 2
        %v924 = vrot.slane %v714, 2
        %v925 = vsel %vm857, %v923, %v924
        %v926 = vrot.slane %v715, 2
        %v927 = vsel %vm857, %v924, %v926
        %v928 = vrot.slane %v716, 2
        %v929 = vrot.slane %v717, 2
        %v930 = vsel %vm857, %v928, %v929
        %v931 = vrot.slane %v718, 2
        %v932 = vsel %vm857, %v929, %v931
        %v933 = vrot.slane %v719, 2
        %v934 = vrot.slane %v720, 2
        %v935 = vsel %vm857, %v933, %v934
        %v936 = vrot.slane %v721, 2
        %v937 = vsel %vm857, %v934, %v936
        %v941 = vrot.slane %v722, 1
        %v942 = vrot.slane %v723, 1
        %v943 = vsel %vm776, %v941, %v942
        %v944 = vrot.slane %v724, 1
        %v945 = vsel %vm776, %v942, %v944
        %v946 = vrot.slane %v722, 2
        %v947 = vrot.slane %v723, 2
        %v948 = vsel %vm857, %v946, %v947
        %v949 = vrot.slane %v724, 2
        %v950 = vsel %vm857, %v947, %v949
        %v954 = vrot.slane %v725, 1
        %v955 = vrot.slane %v726, 1
        %v956 = vsel %vm776, %v954, %v955
        %v957 = vrot.slane %v727, 1
        %v958 = vsel %vm776, %v955, %v957
        %v959 = vrot.slane %v725, 2
        %v960 = vrot.slane %v726, 2
        %v961 = vsel %vm857, %v959, %v960
        %v962 = vrot.slane %v727, 2
        %v963 = vsel %vm857, %v960, %v962
        %964 = vrot.lane.b32.xlu0 %v779, 4
        %v965 = vpop.permute.xlu0 %964
        %966 = vrot.lane.b32.xlu0 %v781, 4
        %v967 = vpop.permute.xlu0 %966
        %968 = vrot.lane.b32.xlu0 %v784, 4
        %v969 = vpop.permute.xlu0 %968
        %970 = vrot.lane.b32.xlu0 %v786, 4
        %v971 = vpop.permute.xlu0 %970
        %972 = vrot.lane.b32.xlu0 %v789, 4
        %v973 = vpop.permute.xlu0 %972
        %974 = vrot.lane.b32.xlu0 %v791, 4
        %v975 = vpop.permute.xlu0 %974
        %976 = vrot.lane.b32.xlu0 %v794, 4
        %v977 = vpop.permute.xlu0 %976
        %978 = vrot.lane.b32.xlu0 %v796, 4
        %v979 = vpop.permute.xlu0 %978
        %980 = vrot.lane.b32.xlu0 %v799, 4
        %v981 = vpop.permute.xlu0 %980
        %982 = vrot.lane.b32.xlu0 %v801, 4
        %v983 = vpop.permute.xlu0 %982
        %984 = vrot.lane.b32.xlu0 %v804, 4
        %v985 = vpop.permute.xlu0 %984
        %986 = vrot.lane.b32.xlu0 %v806, 4
        %v987 = vpop.permute.xlu0 %986
        %988 = vrot.lane.b32.xlu0 %v809, 4
        %v989 = vpop.permute.xlu0 %988
        %990 = vrot.lane.b32.xlu0 %v811, 4
        %v991 = vpop.permute.xlu0 %990
        %992 = vrot.lane.b32.xlu0 %v814, 4
        %v993 = vpop.permute.xlu0 %992
        %994 = vrot.lane.b32.xlu0 %v816, 4
        %v995 = vpop.permute.xlu0 %994
        %996 = vrot.lane.b32.xlu0 %v819, 4
        %v997 = vpop.permute.xlu0 %996
        %998 = vrot.lane.b32.xlu0 %v821, 4
        %v999 = vpop.permute.xlu0 %998
        %1000 = vrot.lane.b32.xlu0 %v824, 4
        %v1001 = vpop.permute.xlu0 %1000
        %1002 = vrot.lane.b32.xlu0 %v826, 4
        %v1003 = vpop.permute.xlu0 %1002
        %1004 = vrot.lane.b32.xlu0 %v829, 4
        %v1005 = vpop.permute.xlu0 %1004
        %1006 = vrot.lane.b32.xlu0 %v831, 4
        %v1007 = vpop.permute.xlu0 %1006
        %1008 = vrot.lane.b32.xlu0 %v834, 4
        %v1009 = vpop.permute.xlu0 %1008
        %1010 = vrot.lane.b32.xlu0 %v836, 4
        %v1011 = vpop.permute.xlu0 %1010
        %1012 = vrot.lane.b32.xlu0 %v839, 4
        %v1013 = vpop.permute.xlu0 %1012
        %1014 = vrot.lane.b32.xlu0 %v841, 4
        %v1015 = vpop.permute.xlu0 %1014
        %1016 = vrot.lane.b32.xlu0 %v844, 4
        %v1017 = vpop.permute.xlu0 %1016
        %1018 = vrot.lane.b32.xlu0 %v846, 4
        %v1019 = vpop.permute.xlu0 %1018
        %1020 = vrot.lane.b32.xlu0 %v849, 4
        %v1021 = vpop.permute.xlu0 %1020
        %1022 = vrot.lane.b32.xlu0 %v851, 4
        %v1023 = vpop.permute.xlu0 %1022
        %1024 = vrot.lane.b32.xlu0 %v854, 4
        %v1025 = vpop.permute.xlu0 %1024
        %1026 = vrot.lane.b32.xlu0 %v856, 4
        %v1027 = vpop.permute.xlu0 %1026
        %1060 = vrot.lane.b32.xlu0 %v860, 8
        %v1061 = vpop.permute.xlu0 %1060
        %1062 = vrot.lane.b32.xlu0 %v862, 8
        %v1063 = vpop.permute.xlu0 %1062
        %1064 = vrot.lane.b32.xlu0 %v865, 8
        %v1065 = vpop.permute.xlu0 %1064
        %1066 = vrot.lane.b32.xlu0 %v867, 8
        %v1067 = vpop.permute.xlu0 %1066
        %1068 = vrot.lane.b32.xlu0 %v870, 8
        %v1069 = vpop.permute.xlu0 %1068
        %1070 = vrot.lane.b32.xlu0 %v872, 8
        %v1071 = vpop.permute.xlu0 %1070
        %1072 = vrot.lane.b32.xlu0 %v875, 8
        %v1073 = vpop.permute.xlu0 %1072
        %1074 = vrot.lane.b32.xlu0 %v877, 8
        %v1075 = vpop.permute.xlu0 %1074
        %1076 = vrot.lane.b32.xlu0 %v880, 8
        %v1077 = vpop.permute.xlu0 %1076
        %1078 = vrot.lane.b32.xlu0 %v882, 8
        %v1079 = vpop.permute.xlu0 %1078
        %1080 = vrot.lane.b32.xlu0 %v885, 8
        %v1081 = vpop.permute.xlu0 %1080
        %1082 = vrot.lane.b32.xlu0 %v887, 8
        %v1083 = vpop.permute.xlu0 %1082
        %1084 = vrot.lane.b32.xlu0 %v890, 8
        %v1085 = vpop.permute.xlu0 %1084
        %1086 = vrot.lane.b32.xlu0 %v892, 8
        %v1087 = vpop.permute.xlu0 %1086
        %1088 = vrot.lane.b32.xlu0 %v895, 8
        %v1089 = vpop.permute.xlu0 %1088
        %1090 = vrot.lane.b32.xlu0 %v897, 8
        %v1091 = vpop.permute.xlu0 %1090
        %1092 = vrot.lane.b32.xlu0 %v900, 8
        %v1093 = vpop.permute.xlu0 %1092
        %1094 = vrot.lane.b32.xlu0 %v902, 8
        %v1095 = vpop.permute.xlu0 %1094
        %1096 = vrot.lane.b32.xlu0 %v905, 8
        %v1097 = vpop.permute.xlu0 %1096
        %1098 = vrot.lane.b32.xlu0 %v907, 8
        %v1099 = vpop.permute.xlu0 %1098
        %1100 = vrot.lane.b32.xlu0 %v910, 8
        %v1101 = vpop.permute.xlu0 %1100
        %1102 = vrot.lane.b32.xlu0 %v912, 8
        %v1103 = vpop.permute.xlu0 %1102
        %1104 = vrot.lane.b32.xlu0 %v915, 8
        %v1105 = vpop.permute.xlu0 %1104
        %1106 = vrot.lane.b32.xlu0 %v917, 8
        %v1107 = vpop.permute.xlu0 %1106
        %1108 = vrot.lane.b32.xlu0 %v920, 8
        %v1109 = vpop.permute.xlu0 %1108
        %1110 = vrot.lane.b32.xlu0 %v922, 8
        %v1111 = vpop.permute.xlu0 %1110
        %1112 = vrot.lane.b32.xlu0 %v925, 8
        %v1113 = vpop.permute.xlu0 %1112
        %1114 = vrot.lane.b32.xlu0 %v927, 8
        %v1115 = vpop.permute.xlu0 %1114
        %1116 = vrot.lane.b32.xlu0 %v930, 8
        %v1117 = vpop.permute.xlu0 %1116
        %1118 = vrot.lane.b32.xlu0 %v932, 8
        %v1119 = vpop.permute.xlu0 %1118
        %1120 = vrot.lane.b32.xlu0 %v935, 8
        %v1121 = vpop.permute.xlu0 %1120
        %1122 = vrot.lane.b32.xlu0 %v937, 8
        %v1123 = vpop.permute.xlu0 %1122
        %1156 = vrot.lane.b32.xlu0 %v677, 12
        %v1157 = vpop.permute.xlu0 %1156
        %1158 = vrot.lane.b32.xlu0 %v678, 12
        %v1159 = vpop.permute.xlu0 %1158
        %1160 = vrot.lane.b32.xlu0 %v680, 12
        %v1161 = vpop.permute.xlu0 %1160
        %1162 = vrot.lane.b32.xlu0 %v681, 12
        %v1163 = vpop.permute.xlu0 %1162
        %1164 = vrot.lane.b32.xlu0 %v683, 12
        %v1165 = vpop.permute.xlu0 %1164
        %1166 = vrot.lane.b32.xlu0 %v684, 12
        %v1167 = vpop.permute.xlu0 %1166
        %1168 = vrot.lane.b32.xlu0 %v686, 12
        %v1169 = vpop.permute.xlu0 %1168
        %1170 = vrot.lane.b32.xlu0 %v687, 12
        %v1171 = vpop.permute.xlu0 %1170
        %1172 = vrot.lane.b32.xlu0 %v689, 12
        %v1173 = vpop.permute.xlu0 %1172
        %1174 = vrot.lane.b32.xlu0 %v690, 12
        %v1175 = vpop.permute.xlu0 %1174
        %1176 = vrot.lane.b32.xlu0 %v692, 12
        %v1177 = vpop.permute.xlu0 %1176
        %1178 = vrot.lane.b32.xlu0 %v693, 12
        %v1179 = vpop.permute.xlu0 %1178
        %1180 = vrot.lane.b32.xlu0 %v695, 12
        %v1181 = vpop.permute.xlu0 %1180
        %1182 = vrot.lane.b32.xlu0 %v696, 12
        %v1183 = vpop.permute.xlu0 %1182
        %1184 = vrot.lane.b32.xlu0 %v698, 12
        %v1185 = vpop.permute.xlu0 %1184
        %1186 = vrot.lane.b32.xlu0 %v699, 12
        %v1187 = vpop.permute.xlu0 %1186
        %1188 = vrot.lane.b32.xlu0 %v701, 12
        %v1189 = vpop.permute.xlu0 %1188
        %1190 = vrot.lane.b32.xlu0 %v702, 12
        %v1191 = vpop.permute.xlu0 %1190
        %1192 = vrot.lane.b32.xlu0 %v704, 12
        %v1193 = vpop.permute.xlu0 %1192
        %1194 = vrot.lane.b32.xlu0 %v705, 12
        %v1195 = vpop.permute.xlu0 %1194
        %1196 = vrot.lane.b32.xlu0 %v707, 12
        %v1197 = vpop.permute.xlu0 %1196
        %1198 = vrot.lane.b32.xlu0 %v708, 12
        %v1199 = vpop.permute.xlu0 %1198
        %1200 = vrot.lane.b32.xlu0 %v710, 12
        %v1201 = vpop.permute.xlu0 %1200
        %1202 = vrot.lane.b32.xlu0 %v711, 12
        %v1203 = vpop.permute.xlu0 %1202
        %1204 = vrot.lane.b32.xlu0 %v713, 12
        %v1205 = vpop.permute.xlu0 %1204
        %1206 = vrot.lane.b32.xlu0 %v714, 12
        %v1207 = vpop.permute.xlu0 %1206
        %1208 = vrot.lane.b32.xlu0 %v716, 12
        %v1209 = vpop.permute.xlu0 %1208
        %1210 = vrot.lane.b32.xlu0 %v717, 12
        %v1211 = vpop.permute.xlu0 %1210
        %1212 = vrot.lane.b32.xlu0 %v719, 12
        %v1213 = vpop.permute.xlu0 %1212
        %1214 = vrot.lane.b32.xlu0 %v720, 12
        %v1215 = vpop.permute.xlu0 %1214
        %1216 = vrot.lane.b32.xlu0 %v722, 12
        %v1217 = vpop.permute.xlu0 %1216
        %1218 = vrot.lane.b32.xlu0 %v723, 12
        %v1219 = vpop.permute.xlu0 %1218
        %1252 = vrot.lane.b32.xlu0 %v784, 16
        %v1253 = vpop.permute.xlu0 %1252
        %1254 = vrot.lane.b32.xlu0 %v786, 16
        %v1255 = vpop.permute.xlu0 %1254
        %1256 = vrot.lane.b32.xlu0 %v789, 16
        %v1257 = vpop.permute.xlu0 %1256
        %1258 = vrot.lane.b32.xlu0 %v791, 16
        %v1259 = vpop.permute.xlu0 %1258
        %1260 = vrot.lane.b32.xlu0 %v794, 16
        %v1261 = vpop.permute.xlu0 %1260
        %1262 = vrot.lane.b32.xlu0 %v796, 16
        %v1263 = vpop.permute.xlu0 %1262
        %1264 = vrot.lane.b32.xlu0 %v799, 16
        %v1265 = vpop.permute.xlu0 %1264
        %1266 = vrot.lane.b32.xlu0 %v801, 16
        %v1267 = vpop.permute.xlu0 %1266
        %1268 = vrot.lane.b32.xlu0 %v804, 16
        %v1269 = vpop.permute.xlu0 %1268
        %1270 = vrot.lane.b32.xlu0 %v806, 16
        %v1271 = vpop.permute.xlu0 %1270
        %1272 = vrot.lane.b32.xlu0 %v809, 16
        %v1273 = vpop.permute.xlu0 %1272
        %1274 = vrot.lane.b32.xlu0 %v811, 16
        %v1275 = vpop.permute.xlu0 %1274
        %1276 = vrot.lane.b32.xlu0 %v814, 16
        %v1277 = vpop.permute.xlu0 %1276
        %1278 = vrot.lane.b32.xlu0 %v816, 16
        %v1279 = vpop.permute.xlu0 %1278
        %1280 = vrot.lane.b32.xlu0 %v819, 16
        %v1281 = vpop.permute.xlu0 %1280
        %1282 = vrot.lane.b32.xlu0 %v821, 16
        %v1283 = vpop.permute.xlu0 %1282
        %1284 = vrot.lane.b32.xlu0 %v824, 16
        %v1285 = vpop.permute.xlu0 %1284
        %1286 = vrot.lane.b32.xlu0 %v826, 16
        %v1287 = vpop.permute.xlu0 %1286
        %1288 = vrot.lane.b32.xlu0 %v829, 16
        %v1289 = vpop.permute.xlu0 %1288
        %1290 = vrot.lane.b32.xlu0 %v831, 16
        %v1291 = vpop.permute.xlu0 %1290
        %1292 = vrot.lane.b32.xlu0 %v834, 16
        %v1293 = vpop.permute.xlu0 %1292
        %1294 = vrot.lane.b32.xlu0 %v836, 16
        %v1295 = vpop.permute.xlu0 %1294
        %1296 = vrot.lane.b32.xlu0 %v839, 16
        %v1297 = vpop.permute.xlu0 %1296
        %1298 = vrot.lane.b32.xlu0 %v841, 16
        %v1299 = vpop.permute.xlu0 %1298
        %1300 = vrot.lane.b32.xlu0 %v844, 16
        %v1301 = vpop.permute.xlu0 %1300
        %1302 = vrot.lane.b32.xlu0 %v846, 16
        %v1303 = vpop.permute.xlu0 %1302
        %1304 = vrot.lane.b32.xlu0 %v849, 16
        %v1305 = vpop.permute.xlu0 %1304
        %1306 = vrot.lane.b32.xlu0 %v851, 16
        %v1307 = vpop.permute.xlu0 %1306
        %1308 = vrot.lane.b32.xlu0 %v854, 16
        %v1309 = vpop.permute.xlu0 %1308
        %1310 = vrot.lane.b32.xlu0 %v856, 16
        %v1311 = vpop.permute.xlu0 %1310
        %1312 = vrot.lane.b32.xlu0 %v943, 16
        %v1313 = vpop.permute.xlu0 %1312
        %1314 = vrot.lane.b32.xlu0 %v945, 16
        %v1315 = vpop.permute.xlu0 %1314
        %1348 = vrot.lane.b32.xlu0 %v865, 20
        %v1349 = vpop.permute.xlu0 %1348
        %1350 = vrot.lane.b32.xlu0 %v867, 20
        %v1351 = vpop.permute.xlu0 %1350
        %1352 = vrot.lane.b32.xlu0 %v870, 20
        %v1353 = vpop.permute.xlu0 %1352
        %1354 = vrot.lane.b32.xlu0 %v872, 20
        %v1355 = vpop.permute.xlu0 %1354
        %1356 = vrot.lane.b32.xlu0 %v875, 20
        %v1357 = vpop.permute.xlu0 %1356
        %1358 = vrot.lane.b32.xlu0 %v877, 20
        %v1359 = vpop.permute.xlu0 %1358
        %1360 = vrot.lane.b32.xlu0 %v880, 20
        %v1361 = vpop.permute.xlu0 %1360
        %1362 = vrot.lane.b32.xlu0 %v882, 20
        %v1363 = vpop.permute.xlu0 %1362
        %1364 = vrot.lane.b32.xlu0 %v885, 20
        %v1365 = vpop.permute.xlu0 %1364
        %1366 = vrot.lane.b32.xlu0 %v887, 20
        %v1367 = vpop.permute.xlu0 %1366
        %1368 = vrot.lane.b32.xlu0 %v890, 20
        %v1369 = vpop.permute.xlu0 %1368
        %1370 = vrot.lane.b32.xlu0 %v892, 20
        %v1371 = vpop.permute.xlu0 %1370
        %1372 = vrot.lane.b32.xlu0 %v895, 20
        %v1373 = vpop.permute.xlu0 %1372
        %1374 = vrot.lane.b32.xlu0 %v897, 20
        %v1375 = vpop.permute.xlu0 %1374
        %1376 = vrot.lane.b32.xlu0 %v900, 20
        %v1377 = vpop.permute.xlu0 %1376
        %1378 = vrot.lane.b32.xlu0 %v902, 20
        %v1379 = vpop.permute.xlu0 %1378
        %1380 = vrot.lane.b32.xlu0 %v905, 20
        %v1381 = vpop.permute.xlu0 %1380
        %1382 = vrot.lane.b32.xlu0 %v907, 20
        %v1383 = vpop.permute.xlu0 %1382
        %1384 = vrot.lane.b32.xlu0 %v910, 20
        %v1385 = vpop.permute.xlu0 %1384
        %1386 = vrot.lane.b32.xlu0 %v912, 20
        %v1387 = vpop.permute.xlu0 %1386
        %1388 = vrot.lane.b32.xlu0 %v915, 20
        %v1389 = vpop.permute.xlu0 %1388
        %1390 = vrot.lane.b32.xlu0 %v917, 20
        %v1391 = vpop.permute.xlu0 %1390
        %1392 = vrot.lane.b32.xlu0 %v920, 20
        %v1393 = vpop.permute.xlu0 %1392
        %1394 = vrot.lane.b32.xlu0 %v922, 20
        %v1395 = vpop.permute.xlu0 %1394
        %1396 = vrot.lane.b32.xlu0 %v925, 20
        %v1397 = vpop.permute.xlu0 %1396
        %1398 = vrot.lane.b32.xlu0 %v927, 20
        %v1399 = vpop.permute.xlu0 %1398
        %1400 = vrot.lane.b32.xlu0 %v930, 20
        %v1401 = vpop.permute.xlu0 %1400
        %1402 = vrot.lane.b32.xlu0 %v932, 20
        %v1403 = vpop.permute.xlu0 %1402
        %1404 = vrot.lane.b32.xlu0 %v935, 20
        %v1405 = vpop.permute.xlu0 %1404
        %1406 = vrot.lane.b32.xlu0 %v937, 20
        %v1407 = vpop.permute.xlu0 %1406
        %1408 = vrot.lane.b32.xlu0 %v948, 20
        %v1409 = vpop.permute.xlu0 %1408
        %1410 = vrot.lane.b32.xlu0 %v950, 20
        %v1411 = vpop.permute.xlu0 %1410
        %1444 = vrot.lane.b32.xlu0 %v680, 24
        %v1445 = vpop.permute.xlu0 %1444
        %1446 = vrot.lane.b32.xlu0 %v681, 24
        %v1447 = vpop.permute.xlu0 %1446
        %1448 = vrot.lane.b32.xlu0 %v683, 24
        %v1449 = vpop.permute.xlu0 %1448
        %1450 = vrot.lane.b32.xlu0 %v684, 24
        %v1451 = vpop.permute.xlu0 %1450
        %1452 = vrot.lane.b32.xlu0 %v686, 24
        %v1453 = vpop.permute.xlu0 %1452
        %1454 = vrot.lane.b32.xlu0 %v687, 24
        %v1455 = vpop.permute.xlu0 %1454
        %1456 = vrot.lane.b32.xlu0 %v689, 24
        %v1457 = vpop.permute.xlu0 %1456
        %1458 = vrot.lane.b32.xlu0 %v690, 24
        %v1459 = vpop.permute.xlu0 %1458
        %1460 = vrot.lane.b32.xlu0 %v692, 24
        %v1461 = vpop.permute.xlu0 %1460
        %1462 = vrot.lane.b32.xlu0 %v693, 24
        %v1463 = vpop.permute.xlu0 %1462
        %1464 = vrot.lane.b32.xlu0 %v695, 24
        %v1465 = vpop.permute.xlu0 %1464
        %1466 = vrot.lane.b32.xlu0 %v696, 24
        %v1467 = vpop.permute.xlu0 %1466
        %1468 = vrot.lane.b32.xlu0 %v698, 24
        %v1469 = vpop.permute.xlu0 %1468
        %1470 = vrot.lane.b32.xlu0 %v699, 24
        %v1471 = vpop.permute.xlu0 %1470
        %1472 = vrot.lane.b32.xlu0 %v701, 24
        %v1473 = vpop.permute.xlu0 %1472
        %1474 = vrot.lane.b32.xlu0 %v702, 24
        %v1475 = vpop.permute.xlu0 %1474
        %1476 = vrot.lane.b32.xlu0 %v704, 24
        %v1477 = vpop.permute.xlu0 %1476
        %1478 = vrot.lane.b32.xlu0 %v705, 24
        %v1479 = vpop.permute.xlu0 %1478
        %1480 = vrot.lane.b32.xlu0 %v707, 24
        %v1481 = vpop.permute.xlu0 %1480
        %1482 = vrot.lane.b32.xlu0 %v708, 24
        %v1483 = vpop.permute.xlu0 %1482
        %1484 = vrot.lane.b32.xlu0 %v710, 24
        %v1485 = vpop.permute.xlu0 %1484
        %1486 = vrot.lane.b32.xlu0 %v711, 24
        %v1487 = vpop.permute.xlu0 %1486
        %1488 = vrot.lane.b32.xlu0 %v713, 24
        %v1489 = vpop.permute.xlu0 %1488
        %1490 = vrot.lane.b32.xlu0 %v714, 24
        %v1491 = vpop.permute.xlu0 %1490
        %1492 = vrot.lane.b32.xlu0 %v716, 24
        %v1493 = vpop.permute.xlu0 %1492
        %1494 = vrot.lane.b32.xlu0 %v717, 24
        %v1495 = vpop.permute.xlu0 %1494
        %1496 = vrot.lane.b32.xlu0 %v719, 24
        %v1497 = vpop.permute.xlu0 %1496
        %1498 = vrot.lane.b32.xlu0 %v720, 24
        %v1499 = vpop.permute.xlu0 %1498
        %1500 = vrot.lane.b32.xlu0 %v722, 24
        %v1501 = vpop.permute.xlu0 %1500
        %1502 = vrot.lane.b32.xlu0 %v723, 24
        %v1503 = vpop.permute.xlu0 %1502
        %1504 = vrot.lane.b32.xlu0 %v725, 24
        %v1505 = vpop.permute.xlu0 %1504
        %1506 = vrot.lane.b32.xlu0 %v726, 24
        %v1507 = vpop.permute.xlu0 %1506
        %1540 = vrot.lane.b32.xlu0 %v789, 28
        %v1541 = vpop.permute.xlu0 %1540
        %1542 = vrot.lane.b32.xlu0 %v791, 28
        %v1543 = vpop.permute.xlu0 %1542
        %1544 = vrot.lane.b32.xlu0 %v794, 28
        %v1545 = vpop.permute.xlu0 %1544
        %1546 = vrot.lane.b32.xlu0 %v796, 28
        %v1547 = vpop.permute.xlu0 %1546
        %1548 = vrot.lane.b32.xlu0 %v799, 28
        %v1549 = vpop.permute.xlu0 %1548
        %1550 = vrot.lane.b32.xlu0 %v801, 28
        %v1551 = vpop.permute.xlu0 %1550
        %1552 = vrot.lane.b32.xlu0 %v804, 28
        %v1553 = vpop.permute.xlu0 %1552
        %1554 = vrot.lane.b32.xlu0 %v806, 28
        %v1555 = vpop.permute.xlu0 %1554
        %1556 = vrot.lane.b32.xlu0 %v809, 28
        %v1557 = vpop.permute.xlu0 %1556
        %1558 = vrot.lane.b32.xlu0 %v811, 28
        %v1559 = vpop.permute.xlu0 %1558
        %1560 = vrot.lane.b32.xlu0 %v814, 28
        %v1561 = vpop.permute.xlu0 %1560
        %1562 = vrot.lane.b32.xlu0 %v816, 28
        %v1563 = vpop.permute.xlu0 %1562
        %1564 = vrot.lane.b32.xlu0 %v819, 28
        %v1565 = vpop.permute.xlu0 %1564
        %1566 = vrot.lane.b32.xlu0 %v821, 28
        %v1567 = vpop.permute.xlu0 %1566
        %1568 = vrot.lane.b32.xlu0 %v824, 28
        %v1569 = vpop.permute.xlu0 %1568
        %1570 = vrot.lane.b32.xlu0 %v826, 28
        %v1571 = vpop.permute.xlu0 %1570
        %1572 = vrot.lane.b32.xlu0 %v829, 28
        %v1573 = vpop.permute.xlu0 %1572
        %1574 = vrot.lane.b32.xlu0 %v831, 28
        %v1575 = vpop.permute.xlu0 %1574
        %1576 = vrot.lane.b32.xlu0 %v834, 28
        %v1577 = vpop.permute.xlu0 %1576
        %1578 = vrot.lane.b32.xlu0 %v836, 28
        %v1579 = vpop.permute.xlu0 %1578
        %1580 = vrot.lane.b32.xlu0 %v839, 28
        %v1581 = vpop.permute.xlu0 %1580
        %1582 = vrot.lane.b32.xlu0 %v841, 28
        %v1583 = vpop.permute.xlu0 %1582
        %1584 = vrot.lane.b32.xlu0 %v844, 28
        %v1585 = vpop.permute.xlu0 %1584
        %1586 = vrot.lane.b32.xlu0 %v846, 28
        %v1587 = vpop.permute.xlu0 %1586
        %1588 = vrot.lane.b32.xlu0 %v849, 28
        %v1589 = vpop.permute.xlu0 %1588
        %1590 = vrot.lane.b32.xlu0 %v851, 28
        %v1591 = vpop.permute.xlu0 %1590
        %1592 = vrot.lane.b32.xlu0 %v854, 28
        %v1593 = vpop.permute.xlu0 %1592
        %1594 = vrot.lane.b32.xlu0 %v856, 28
        %v1595 = vpop.permute.xlu0 %1594
        %1596 = vrot.lane.b32.xlu0 %v943, 28
        %v1597 = vpop.permute.xlu0 %1596
        %1598 = vrot.lane.b32.xlu0 %v945, 28
        %v1599 = vpop.permute.xlu0 %1598
        %1600 = vrot.lane.b32.xlu0 %v956, 28
        %v1601 = vpop.permute.xlu0 %1600
        %1602 = vrot.lane.b32.xlu0 %v958, 28
        %v1603 = vpop.permute.xlu0 %1602
        %1636 = vrot.lane.b32.xlu0 %v870, 32
        %v1637 = vpop.permute.xlu0 %1636
        %1638 = vrot.lane.b32.xlu0 %v872, 32
        %v1639 = vpop.permute.xlu0 %1638
        %1640 = vrot.lane.b32.xlu0 %v875, 32
        %v1641 = vpop.permute.xlu0 %1640
        %1642 = vrot.lane.b32.xlu0 %v877, 32
        %v1643 = vpop.permute.xlu0 %1642
        %1644 = vrot.lane.b32.xlu0 %v880, 32
        %v1645 = vpop.permute.xlu0 %1644
        %1646 = vrot.lane.b32.xlu0 %v882, 32
        %v1647 = vpop.permute.xlu0 %1646
        %1648 = vrot.lane.b32.xlu0 %v885, 32
        %v1649 = vpop.permute.xlu0 %1648
        %1650 = vrot.lane.b32.xlu0 %v887, 32
        %v1651 = vpop.permute.xlu0 %1650
        %1652 = vrot.lane.b32.xlu0 %v890, 32
        %v1653 = vpop.permute.xlu0 %1652
        %1654 = vrot.lane.b32.xlu0 %v892, 32
        %v1655 = vpop.permute.xlu0 %1654
        %1656 = vrot.lane.b32.xlu0 %v895, 32
        %v1657 = vpop.permute.xlu0 %1656
        %1658 = vrot.lane.b32.xlu0 %v897, 32
        %v1659 = vpop.permute.xlu0 %1658
        %1660 = vrot.lane.b32.xlu0 %v900, 32
        %v1661 = vpop.permute.xlu0 %1660
        %1662 = vrot.lane.b32.xlu0 %v902, 32
        %v1663 = vpop.permute.xlu0 %1662
        %1664 = vrot.lane.b32.xlu0 %v905, 32
        %v1665 = vpop.permute.xlu0 %1664
        %1666 = vrot.lane.b32.xlu0 %v907, 32
        %v1667 = vpop.permute.xlu0 %1666
        %1668 = vrot.lane.b32.xlu0 %v910, 32
        %v1669 = vpop.permute.xlu0 %1668
        %1670 = vrot.lane.b32.xlu0 %v912, 32
        %v1671 = vpop.permute.xlu0 %1670
        %1672 = vrot.lane.b32.xlu0 %v915, 32
        %v1673 = vpop.permute.xlu0 %1672
        %1674 = vrot.lane.b32.xlu0 %v917, 32
        %v1675 = vpop.permute.xlu0 %1674
        %1676 = vrot.lane.b32.xlu0 %v920, 32
        %v1677 = vpop.permute.xlu0 %1676
        %1678 = vrot.lane.b32.xlu0 %v922, 32
        %v1679 = vpop.permute.xlu0 %1678
        %1680 = vrot.lane.b32.xlu0 %v925, 32
        %v1681 = vpop.permute.xlu0 %1680
        %1682 = vrot.lane.b32.xlu0 %v927, 32
        %v1683 = vpop.permute.xlu0 %1682
        %1684 = vrot.lane.b32.xlu0 %v930, 32
        %v1685 = vpop.permute.xlu0 %1684
        %1686 = vrot.lane.b32.xlu0 %v932, 32
        %v1687 = vpop.permute.xlu0 %1686
        %1688 = vrot.lane.b32.xlu0 %v935, 32
        %v1689 = vpop.permute.xlu0 %1688
        %1690 = vrot.lane.b32.xlu0 %v937, 32
        %v1691 = vpop.permute.xlu0 %1690
        %1692 = vrot.lane.b32.xlu0 %v948, 32
        %v1693 = vpop.permute.xlu0 %1692
        %1694 = vrot.lane.b32.xlu0 %v950, 32
        %v1695 = vpop.permute.xlu0 %1694
        %1696 = vrot.lane.b32.xlu0 %v961, 32
        %v1697 = vpop.permute.xlu0 %1696
        %1698 = vrot.lane.b32.xlu0 %v963, 32
        %v1699 = vpop.permute.xlu0 %1698
        %v1732 = vsel %vm422, %v674, %v965
        %v1733 = vsel %vm422, %v675, %v967
        %v1734 = vsel %vm422, %v677, %v969
        %v1735 = vsel %vm422, %v678, %v971
        %v1736 = vsel %vm422, %v680, %v973
        %v1737 = vsel %vm422, %v681, %v975
        %v1738 = vsel %vm422, %v683, %v977
        %v1739 = vsel %vm422, %v684, %v979
        %v1740 = vsel %vm422, %v686, %v981
        %v1741 = vsel %vm422, %v687, %v983
        %v1742 = vsel %vm422, %v689, %v985
        %v1743 = vsel %vm422, %v690, %v987
        %v1744 = vsel %vm422, %v692, %v989
        %v1745 = vsel %vm422, %v693, %v991
        %v1746 = vsel %vm422, %v695, %v993
        %v1747 = vsel %vm422, %v696, %v995
        %v1748 = vsel %vm422, %v698, %v997
        %v1749 = vsel %vm422, %v699, %v999
        %v1750 = vsel %vm422, %v701, %v1001
        %v1751 = vsel %vm422, %v702, %v1003
        %v1752 = vsel %vm422, %v704, %v1005
        %v1753 = vsel %vm422, %v705, %v1007
        %v1754 = vsel %vm422, %v707, %v1009
        %v1755 = vsel %vm422, %v708, %v1011
        %v1756 = vsel %vm422, %v710, %v1013
        %v1757 = vsel %vm422, %v711, %v1015
        %v1758 = vsel %vm422, %v713, %v1017
        %v1759 = vsel %vm422, %v714, %v1019
        %v1760 = vsel %vm422, %v716, %v1021
        %v1761 = vsel %vm422, %v717, %v1023
        %v1762 = vsel %vm422, %v719, %v1025
        %v1763 = vsel %vm422, %v720, %v1027
        %vm1764 = vcmask 64512
        %v1765 = vsel %vm1764, %v1732, %v1061
        %v1766 = vsel %vm1764, %v1733, %v1063
        %v1767 = vsel %vm1764, %v1734, %v1065
        %v1768 = vsel %vm1764, %v1735, %v1067
        %v1769 = vsel %vm1764, %v1736, %v1069
        %v1770 = vsel %vm1764, %v1737, %v1071
        %v1771 = vsel %vm1764, %v1738, %v1073
        %v1772 = vsel %vm1764, %v1739, %v1075
        %v1773 = vsel %vm1764, %v1740, %v1077
        %v1774 = vsel %vm1764, %v1741, %v1079
        %v1775 = vsel %vm1764, %v1742, %v1081
        %v1776 = vsel %vm1764, %v1743, %v1083
        %v1777 = vsel %vm1764, %v1744, %v1085
        %v1778 = vsel %vm1764, %v1745, %v1087
        %v1779 = vsel %vm1764, %v1746, %v1089
        %v1780 = vsel %vm1764, %v1747, %v1091
        %v1781 = vsel %vm1764, %v1748, %v1093
        %v1782 = vsel %vm1764, %v1749, %v1095
        %v1783 = vsel %vm1764, %v1750, %v1097
        %v1784 = vsel %vm1764, %v1751, %v1099
        %v1785 = vsel %vm1764, %v1752, %v1101
        %v1786 = vsel %vm1764, %v1753, %v1103
        %v1787 = vsel %vm1764, %v1754, %v1105
        %v1788 = vsel %vm1764, %v1755, %v1107
        %v1789 = vsel %vm1764, %v1756, %v1109
        %v1790 = vsel %vm1764, %v1757, %v1111
        %v1791 = vsel %vm1764, %v1758, %v1113
        %v1792 = vsel %vm1764, %v1759, %v1115
        %v1793 = vsel %vm1764, %v1760, %v1117
        %v1794 = vsel %vm1764, %v1761, %v1119
        %v1795 = vsel %vm1764, %v1762, %v1121
        %v1796 = vsel %vm1764, %v1763, %v1123
        %vm1797 = vcmask 97280
        %v1798 = vsel %vm1797, %v1765, %v1157
        %v1799 = vsel %vm1797, %v1766, %v1159
        %v1800 = vsel %vm1797, %v1767, %v1161
        %v1801 = vsel %vm1797, %v1768, %v1163
        %v1802 = vsel %vm1797, %v1769, %v1165
        %v1803 = vsel %vm1797, %v1770, %v1167
        %v1804 = vsel %vm1797, %v1771, %v1169
        %v1805 = vsel %vm1797, %v1772, %v1171
        %v1806 = vsel %vm1797, %v1773, %v1173
        %v1807 = vsel %vm1797, %v1774, %v1175
        %v1808 = vsel %vm1797, %v1775, %v1177
        %v1809 = vsel %vm1797, %v1776, %v1179
        %v1810 = vsel %vm1797, %v1777, %v1181
        %v1811 = vsel %vm1797, %v1778, %v1183
        %v1812 = vsel %vm1797, %v1779, %v1185
        %v1813 = vsel %vm1797, %v1780, %v1187
        %v1814 = vsel %vm1797, %v1781, %v1189
        %v1815 = vsel %vm1797, %v1782, %v1191
        %v1816 = vsel %vm1797, %v1783, %v1193
        %v1817 = vsel %vm1797, %v1784, %v1195
        %v1818 = vsel %vm1797, %v1785, %v1197
        %v1819 = vsel %vm1797, %v1786, %v1199
        %v1820 = vsel %vm1797, %v1787, %v1201
        %v1821 = vsel %vm1797, %v1788, %v1203
        %v1822 = vsel %vm1797, %v1789, %v1205
        %v1823 = vsel %vm1797, %v1790, %v1207
        %v1824 = vsel %vm1797, %v1791, %v1209
        %v1825 = vsel %vm1797, %v1792, %v1211
        %v1826 = vsel %vm1797, %v1793, %v1213
        %v1827 = vsel %vm1797, %v1794, %v1215
        %v1828 = vsel %vm1797, %v1795, %v1217
        %v1829 = vsel %vm1797, %v1796, %v1219
        %vm1830 = vcmask 130048
        %v1831 = vsel %vm1830, %v1798, %v1253
        %v1832 = vsel %vm1830, %v1799, %v1255
        %v1833 = vsel %vm1830, %v1800, %v1257
        %v1834 = vsel %vm1830, %v1801, %v1259
        %v1835 = vsel %vm1830, %v1802, %v1261
        %v1836 = vsel %vm1830, %v1803, %v1263
        %v1837 = vsel %vm1830, %v1804, %v1265
        %v1838 = vsel %vm1830, %v1805, %v1267
        %v1839 = vsel %vm1830, %v1806, %v1269
        %v1840 = vsel %vm1830, %v1807, %v1271
        %v1841 = vsel %vm1830, %v1808, %v1273
        %v1842 = vsel %vm1830, %v1809, %v1275
        %v1843 = vsel %vm1830, %v1810, %v1277
        %v1844 = vsel %vm1830, %v1811, %v1279
        %v1845 = vsel %vm1830, %v1812, %v1281
        %v1846 = vsel %vm1830, %v1813, %v1283
        %v1847 = vsel %vm1830, %v1814, %v1285
        %v1848 = vsel %vm1830, %v1815, %v1287
        %v1849 = vsel %vm1830, %v1816, %v1289
        %v1850 = vsel %vm1830, %v1817, %v1291
        %v1851 = vsel %vm1830, %v1818, %v1293
        %v1852 = vsel %vm1830, %v1819, %v1295
        %v1853 = vsel %vm1830, %v1820, %v1297
        %v1854 = vsel %vm1830, %v1821, %v1299
        %v1855 = vsel %vm1830, %v1822, %v1301
        %v1856 = vsel %vm1830, %v1823, %v1303
        %v1857 = vsel %vm1830, %v1824, %v1305
        %v1858 = vsel %vm1830, %v1825, %v1307
        %v1859 = vsel %vm1830, %v1826, %v1309
        %v1860 = vsel %vm1830, %v1827, %v1311
        %v1861 = vsel %vm1830, %v1828, %v1313
        %v1862 = vsel %vm1830, %v1829, %v1315
        %vm1863 = vcmask 162816
        %v1864 = vsel %vm1863, %v1831, %v1349
        %v1865 = vsel %vm1863, %v1832, %v1351
        %v1866 = vsel %vm1863, %v1833, %v1353
        %v1867 = vsel %vm1863, %v1834, %v1355
        %v1868 = vsel %vm1863, %v1835, %v1357
        %v1869 = vsel %vm1863, %v1836, %v1359
        %v1870 = vsel %vm1863, %v1837, %v1361
        %v1871 = vsel %vm1863, %v1838, %v1363
        %v1872 = vsel %vm1863, %v1839, %v1365
        %v1873 = vsel %vm1863, %v1840, %v1367
        %v1874 = vsel %vm1863, %v1841, %v1369
        %v1875 = vsel %vm1863, %v1842, %v1371
        %v1876 = vsel %vm1863, %v1843, %v1373
        %v1877 = vsel %vm1863, %v1844, %v1375
        %v1878 = vsel %vm1863, %v1845, %v1377
        %v1879 = vsel %vm1863, %v1846, %v1379
        %v1880 = vsel %vm1863, %v1847, %v1381
        %v1881 = vsel %vm1863, %v1848, %v1383
        %v1882 = vsel %vm1863, %v1849, %v1385
        %v1883 = vsel %vm1863, %v1850, %v1387
        %v1884 = vsel %vm1863, %v1851, %v1389
        %v1885 = vsel %vm1863, %v1852, %v1391
        %v1886 = vsel %vm1863, %v1853, %v1393
        %v1887 = vsel %vm1863, %v1854, %v1395
        %v1888 = vsel %vm1863, %v1855, %v1397
        %v1889 = vsel %vm1863, %v1856, %v1399
        %v1890 = vsel %vm1863, %v1857, %v1401
        %v1891 = vsel %vm1863, %v1858, %v1403
        %v1892 = vsel %vm1863, %v1859, %v1405
        %v1893 = vsel %vm1863, %v1860, %v1407
        %v1894 = vsel %vm1863, %v1861, %v1409
        %v1895 = vsel %vm1863, %v1862, %v1411
        %vm1896 = vcmask 195584
        %v1897 = vsel %vm1896, %v1864, %v1445
        %v1898 = vsel %vm1896, %v1865, %v1447
        %v1899 = vsel %vm1896, %v1866, %v1449
        %v1900 = vsel %vm1896, %v1867, %v1451
        %v1901 = vsel %vm1896, %v1868, %v1453
        %v1902 = vsel %vm1896, %v1869, %v1455
        %v1903 = vsel %vm1896, %v1870, %v1457
        %v1904 = vsel %vm1896, %v1871, %v1459
        %v1905 = vsel %vm1896, %v1872, %v1461
        %v1906 = vsel %vm1896, %v1873, %v1463
        %v1907 = vsel %vm1896, %v1874, %v1465
        %v1908 = vsel %vm1896, %v1875, %v1467
        %v1909 = vsel %vm1896, %v1876, %v1469
        %v1910 = vsel %vm1896, %v1877, %v1471
        %v1911 = vsel %vm1896, %v1878, %v1473
        %v1912 = vsel %vm1896, %v1879, %v1475
        %v1913 = vsel %vm1896, %v1880, %v1477
        %v1914 = vsel %vm1896, %v1881, %v1479
        %v1915 = vsel %vm1896, %v1882, %v1481
        %v1916 = vsel %vm1896, %v1883, %v1483
        %v1917 = vsel %vm1896, %v1884, %v1485
        %v1918 = vsel %vm1896, %v1885, %v1487
        %v1919 = vsel %vm1896, %v1886, %v1489
        %v1920 = vsel %vm1896, %v1887, %v1491
        %v1921 = vsel %vm1896, %v1888, %v1493
        %v1922 = vsel %vm1896, %v1889, %v1495
        %v1923 = vsel %vm1896, %v1890, %v1497
        %v1924 = vsel %vm1896, %v1891, %v1499
        %v1925 = vsel %vm1896, %v1892, %v1501
        %v1926 = vsel %vm1896, %v1893, %v1503
        %v1927 = vsel %vm1896, %v1894, %v1505
        %v1928 = vsel %vm1896, %v1895, %v1507
        %vm1929 = vcmask 228352
        %v1930 = vsel %vm1929, %v1897, %v1541
        %v1931 = vsel %vm1929, %v1898, %v1543
        %v1932 = vsel %vm1929, %v1899, %v1545
        %v1933 = vsel %vm1929, %v1900, %v1547
        %v1934 = vsel %vm1929, %v1901, %v1549
        %v1935 = vsel %vm1929, %v1902, %v1551
        %v1936 = vsel %vm1929, %v1903, %v1553
        %v1937 = vsel %vm1929, %v1904, %v1555
        %v1938 = vsel %vm1929, %v1905, %v1557
        %v1939 = vsel %vm1929, %v1906, %v1559
        %v1940 = vsel %vm1929, %v1907, %v1561
        %v1941 = vsel %vm1929, %v1908, %v1563
        %v1942 = vsel %vm1929, %v1909, %v1565
        %v1943 = vsel %vm1929, %v1910, %v1567
        %v1944 = vsel %vm1929, %v1911, %v1569
        %v1945 = vsel %vm1929, %v1912, %v1571
        %v1946 = vsel %vm1929, %v1913, %v1573
        %v1947 = vsel %vm1929, %v1914, %v1575
        %v1948 = vsel %vm1929, %v1915, %v1577
        %v1949 = vsel %vm1929, %v1916, %v1579
        %v1950 = vsel %vm1929, %v1917, %v1581
        %v1951 = vsel %vm1929, %v1918, %v1583
        %v1952 = vsel %vm1929, %v1919, %v1585
        %v1953 = vsel %vm1929, %v1920, %v1587
        %v1954 = vsel %vm1929, %v1921, %v1589
        %v1955 = vsel %vm1929, %v1922, %v1591
        %v1956 = vsel %vm1929, %v1923, %v1593
        %v1957 = vsel %vm1929, %v1924, %v1595
        %v1958 = vsel %vm1929, %v1925, %v1597
        %v1959 = vsel %vm1929, %v1926, %v1599
        %v1960 = vsel %vm1929, %v1927, %v1601
        %v1961 = vsel %vm1929, %v1928, %v1603
        %vm1962 = vcmask 261120
        %v1963 = vsel %vm1962, %v1930, %v1637
        %v1964 = vsel %vm1962, %v1931, %v1639
        %v1965 = vsel %vm1962, %v1932, %v1641
        %v1966 = vsel %vm1962, %v1933, %v1643
        %v1967 = vsel %vm1962, %v1934, %v1645
        %v1968 = vsel %vm1962, %v1935, %v1647
        %v1969 = vsel %vm1962, %v1936, %v1649
        %v1970 = vsel %vm1962, %v1937, %v1651
        %v1971 = vsel %vm1962, %v1938, %v1653
        %v1972 = vsel %vm1962, %v1939, %v1655
        %v1973 = vsel %vm1962, %v1940, %v1657
        %v1974 = vsel %vm1962, %v1941, %v1659
        %v1975 = vsel %vm1962, %v1942, %v1661
        %v1976 = vsel %vm1962, %v1943, %v1663
        %v1977 = vsel %vm1962, %v1944, %v1665
        %v1978 = vsel %vm1962, %v1945, %v1667
        %v1979 = vsel %vm1962, %v1946, %v1669
        %v1980 = vsel %vm1962, %v1947, %v1671
        %v1981 = vsel %vm1962, %v1948, %v1673
        %v1982 = vsel %vm1962, %v1949, %v1675
        %v1983 = vsel %vm1962, %v1950, %v1677
        %v1984 = vsel %vm1962, %v1951, %v1679
        %v1985 = vsel %vm1962, %v1952, %v1681
        %v1986 = vsel %vm1962, %v1953, %v1683
        %v1987 = vsel %vm1962, %v1954, %v1685
        %v1988 = vsel %vm1962, %v1955, %v1687
        %v1989 = vsel %vm1962, %v1956, %v1689
        %v1990 = vsel %vm1962, %v1957, %v1691
        %v1991 = vsel %vm1962, %v1958, %v1693
        %v1992 = vsel %vm1962, %v1959, %v1695
        %v1993 = vsel %vm1962, %v1960, %v1697
        %v1994 = vsel %vm1962, %v1961, %v1699
        %v1995 = vpack.c.bf16 %v1964, %v1963
        %v1996 = vpack.c.bf16 %v1966, %v1965
        %v1997 = vpack.c.bf16 %v1968, %v1967
        %v1998 = vpack.c.bf16 %v1970, %v1969
        %v1999 = vpack.c.bf16 %v1972, %v1971
        %v2000 = vpack.c.bf16 %v1974, %v1973
        %v2001 = vpack.c.bf16 %v1976, %v1975
        %v2002 = vpack.c.bf16 %v1978, %v1977
        %v2003 = vpack.c.bf16 %v1980, %v1979
        %v2004 = vpack.c.bf16 %v1982, %v1981
        %v2005 = vpack.c.bf16 %v1984, %v1983
        %v2006 = vpack.c.bf16 %v1986, %v1985
        %v2007 = vpack.c.bf16 %v1988, %v1987
        %v2008 = vpack.c.bf16 %v1990, %v1989
        %v2009 = vpack.c.bf16 %v1992, %v1991
        %v2010 = vpack.c.bf16 %v1994, %v1993
        %v2011 = vld [vmem:[%s2] sm:$0xf]
        %v2012 = vld [vmem:[%s2 + $0x4] sm:$0xf]
        %v2013 = vld [vmem:[%s2 + $0x8] sm:$0xf]
        %v2014 = vld [vmem:[%s2 + $0xc] sm:$0xf]
        %v2015 = vld [vmem:[%s2 + $0x10] sm:$0x3]
        %v2016 = vld [vmem:[%s6] sm:$0x1]
        %v2018 = vperm.slane %v2016, 0
        %v2025 = vunpack.c.l.b16 %v2011
        %v2026 = vunpack.c.l.b16 %v2012
        %v2027 = vunpack.c.l.b16 %v2013
        %v2028 = vunpack.c.l.b16 %v2014
        %v2029 = vunpack.c.l.b16 %v2015
        %v2030 = vpack.c.b16 %v2026, %v2025
        %v2031 = vpack.c.b16 %v2028, %v2027
        %v2032 = vpack.c.b16 %v2029, %v2029
        %vm2035 = vcmask 293888
        %v2037 = vsel %vm2035, %v1995, 0
        %v2040 = vsel %vm2035, %v1996, 0
        %v2043 = vsel %vm2035, %v1997, 0
        %v2046 = vsel %vm2035, %v1998, 0
        %v2049 = vsel %vm2035, %v1999, 0
        %v2052 = vsel %vm2035, %v2000, 0
        %v2055 = vsel %vm2035, %v2001, 0
        %v2058 = vsel %vm2035, %v2002, 0
        %v2061 = vsel %vm2035, %v2003, 0
        %v2064 = vsel %vm2035, %v2004, 0
        %v2067 = vsel %vm2035, %v2005, 0
        %v2070 = vsel %vm2035, %v2006, 0
        %v2073 = vsel %vm2035, %v2007, 0
        %v2076 = vsel %vm2035, %v2008, 0
        %v2079 = vsel %vm2035, %v2009, 0
        %v2082 = vsel %vm2035, %v2010, 0
        %v2085 = vsel %vm471, %v2032, 0
        %2087 = vmatpush.bf16.msra.mxu0 0
        %2088 = vmatpush.bf16.msra.mxu0 0
        %2089 = vmatpush.bf16.msra.mxu0 0
        %2090 = vmatpush.bf16.msra.mxu0 0
        %2091 = vmatpush.bf16.msra.mxu0 0
        %2092 = vmatpush.bf16.msra.mxu0 %v2085
        %2093 = vmatpush.bf16.msra.mxu0 %v2031
        %2094 = vmatpush.bf16.msra.mxu0 %v2030
        %2095 = vmatmul.bf16.gmra.mxu0 %v2037
        %v2096 = vpop.f32.mrf.mxu0
        %v2097 = vadd.f32 %v2018, %v2096
        %v2098 = vpop.f32.mrf.mxu0
        %v2099 = vadd.f32 %v2018, %v2098
        %2100 = vmatmul.bf16.gmra.mxu0 %v2040
        %v2101 = vpop.f32.mrf.mxu0
        %v2102 = vadd.f32 %v2018, %v2101
        %v2103 = vpop.f32.mrf.mxu0
        %v2104 = vadd.f32 %v2018, %v2103
        %2105 = vmatmul.bf16.gmra.mxu0 %v2043
        %v2106 = vpop.f32.mrf.mxu0
        %v2107 = vadd.f32 %v2018, %v2106
        %v2108 = vpop.f32.mrf.mxu0
        %v2109 = vadd.f32 %v2018, %v2108
        %2110 = vmatmul.bf16.gmra.mxu0 %v2046
        %v2111 = vpop.f32.mrf.mxu0
        %v2112 = vadd.f32 %v2018, %v2111
        %v2113 = vpop.f32.mrf.mxu0
        %v2114 = vadd.f32 %v2018, %v2113
        %2115 = vmatmul.bf16.gmra.mxu0 %v2049
        %v2116 = vpop.f32.mrf.mxu0
        %v2117 = vadd.f32 %v2018, %v2116
        %v2118 = vpop.f32.mrf.mxu0
        %v2119 = vadd.f32 %v2018, %v2118
        %2120 = vmatmul.bf16.gmra.mxu0 %v2052
        %v2121 = vpop.f32.mrf.mxu0
        %v2122 = vadd.f32 %v2018, %v2121
        %v2123 = vpop.f32.mrf.mxu0
        %v2124 = vadd.f32 %v2018, %v2123
        %2125 = vmatmul.bf16.gmra.mxu0 %v2055
        %v2126 = vpop.f32.mrf.mxu0
        %v2127 = vadd.f32 %v2018, %v2126
        %v2128 = vpop.f32.mrf.mxu0
        %v2129 = vadd.f32 %v2018, %v2128
        %2130 = vmatmul.bf16.gmra.mxu0 %v2058
        %v2131 = vpop.f32.mrf.mxu0
        %v2132 = vadd.f32 %v2018, %v2131
        %v2133 = vpop.f32.mrf.mxu0
        %v2134 = vadd.f32 %v2018, %v2133
        %2135 = vmatmul.bf16.gmra.mxu0 %v2061
        %v2136 = vpop.f32.mrf.mxu0
        %v2137 = vadd.f32 %v2018, %v2136
        %v2138 = vpop.f32.mrf.mxu0
        %v2139 = vadd.f32 %v2018, %v2138
        %2140 = vmatmul.bf16.gmra.mxu0 %v2064
        %v2141 = vpop.f32.mrf.mxu0
        %v2142 = vadd.f32 %v2018, %v2141
        %v2143 = vpop.f32.mrf.mxu0
        %v2144 = vadd.f32 %v2018, %v2143
        %2145 = vmatmul.bf16.gmra.mxu0 %v2067
        %v2146 = vpop.f32.mrf.mxu0
        %v2147 = vadd.f32 %v2018, %v2146
        %v2148 = vpop.f32.mrf.mxu0
        %v2149 = vadd.f32 %v2018, %v2148
        %2150 = vmatmul.bf16.gmra.mxu0 %v2070
        %v2151 = vpop.f32.mrf.mxu0
        %v2152 = vadd.f32 %v2018, %v2151
        %v2153 = vpop.f32.mrf.mxu0
        %v2154 = vadd.f32 %v2018, %v2153
        %2155 = vmatmul.bf16.gmra.mxu0 %v2073
        %v2156 = vpop.f32.mrf.mxu0
        %v2157 = vadd.f32 %v2018, %v2156
        %v2158 = vpop.f32.mrf.mxu0
        %v2159 = vadd.f32 %v2018, %v2158
        %2160 = vmatmul.bf16.gmra.mxu0 %v2076
        %v2161 = vpop.f32.mrf.mxu0
        %v2162 = vadd.f32 %v2018, %v2161
        %v2163 = vpop.f32.mrf.mxu0
        %v2164 = vadd.f32 %v2018, %v2163
        %2165 = vmatmul.bf16.gmra.mxu0 %v2079
        %v2166 = vpop.f32.mrf.mxu0
        %v2167 = vadd.f32 %v2018, %v2166
        %v2168 = vpop.f32.mrf.mxu0
        %v2169 = vadd.f32 %v2018, %v2168
        %2170 = vmatmul.bf16.gmra.mxu0 %v2082
        %v2171 = vpop.f32.mrf.mxu0
        %v2172 = vadd.f32 %v2018, %v2171
        %v2173 = vpop.f32.mrf.mxu0
        %v2174 = vadd.f32 %v2018, %v2173
        %2175 = vdwg.mxu0
        %v2176 = vmax.f32 %v2097, 0.0
        %v2177 = vmax.f32 %v2099, 0.0
        %v2178 = vmax.f32 %v2102, 0.0
        %v2179 = vmax.f32 %v2104, 0.0
        %v2180 = vmax.f32 %v2107, 0.0
        %v2181 = vmax.f32 %v2109, 0.0
        %v2182 = vmax.f32 %v2112, 0.0
        %v2183 = vmax.f32 %v2114, 0.0
        %v2184 = vmax.f32 %v2117, 0.0
        %v2185 = vmax.f32 %v2119, 0.0
        %v2186 = vmax.f32 %v2122, 0.0
        %v2187 = vmax.f32 %v2124, 0.0
        %v2188 = vmax.f32 %v2127, 0.0
        %v2189 = vmax.f32 %v2129, 0.0
        %v2190 = vmax.f32 %v2132, 0.0
        %v2191 = vmax.f32 %v2134, 0.0
        %v2192 = vmax.f32 %v2137, 0.0
        %v2193 = vmax.f32 %v2139, 0.0
        %v2194 = vmax.f32 %v2142, 0.0
        %v2195 = vmax.f32 %v2144, 0.0
        %v2196 = vmax.f32 %v2147, 0.0
        %v2197 = vmax.f32 %v2149, 0.0
        %v2198 = vmax.f32 %v2152, 0.0
        %v2199 = vmax.f32 %v2154, 0.0
        %v2200 = vmax.f32 %v2157, 0.0
        %v2201 = vmax.f32 %v2159, 0.0
        %v2202 = vmax.f32 %v2162, 0.0
        %v2203 = vmax.f32 %v2164, 0.0
        %v2204 = vmax.f32 %v2167, 0.0
        %v2205 = vmax.f32 %v2169, 0.0
        %v2206 = vmax.f32 %v2172, 0.0
        %v2207 = vmax.f32 %v2174, 0.0
        %v2208 = vpack.c.bf16 %v2177, %v2176
        %v2209 = vpack.c.bf16 %v2179, %v2178
        %v2210 = vpack.c.bf16 %v2181, %v2180
        %v2211 = vpack.c.bf16 %v2183, %v2182
        %v2212 = vpack.c.bf16 %v2185, %v2184
        %v2213 = vpack.c.bf16 %v2187, %v2186
        %v2214 = vpack.c.bf16 %v2189, %v2188
        %v2215 = vpack.c.bf16 %v2191, %v2190
        %v2216 = vpack.c.bf16 %v2193, %v2192
        %v2217 = vpack.c.bf16 %v2195, %v2194
        %v2218 = vpack.c.bf16 %v2197, %v2196
        %v2219 = vpack.c.bf16 %v2199, %v2198
        %v2220 = vpack.c.bf16 %v2201, %v2200
        %v2221 = vpack.c.bf16 %v2203, %v2202
        %v2222 = vpack.c.bf16 %v2205, %v2204
        %v2223 = vpack.c.bf16 %v2207, %v2206
        %v2224 = vld [vmem:[%s3] sm:$0x3]
        %v2225 = vld [vmem:[%s4] sm:$0x3]
        %v2227 = vsel %vm471, %v2225, 0
        %2229 = vmatpush.bf16.msra.mxu0 0
        %2230 = vmatpush.bf16.msra.mxu0 0
        %2231 = vmatpush.bf16.msra.mxu0 0
        %2232 = vmatpush.bf16.msra.mxu0 0
        %2233 = vmatpush.bf16.msra.mxu0 0
        %2234 = vmatpush.bf16.msra.mxu0 0
        %2235 = vmatpush.bf16.msra.mxu0 0
        %2236 = vmatpush.bf16.msra.mxu0 %v2227
        %2237 = vmatmul.bf16.gmra.mxu0 %v424
        %v2238 = vpop.f32.mrf.mxu0
        %v2239 = vadd.f32 0.0, %v2238
        %v2240 = vpop.f32.mrf.mxu0
        %v2241 = vadd.f32 0.0, %v2240
        %2242 = vmatmul.bf16.gmra.mxu0 %v427
        %v2243 = vpop.f32.mrf.mxu0
        %v2244 = vadd.f32 0.0, %v2243
        %v2245 = vpop.f32.mrf.mxu0
        %v2246 = vadd.f32 0.0, %v2245
        %2247 = vmatmul.bf16.gmra.mxu0 %v430
        %v2248 = vpop.f32.mrf.mxu0
        %v2249 = vadd.f32 0.0, %v2248
        %v2250 = vpop.f32.mrf.mxu0
        %v2251 = vadd.f32 0.0, %v2250
        %2252 = vmatmul.bf16.gmra.mxu0 %v433
        %v2253 = vpop.f32.mrf.mxu0
        %v2254 = vadd.f32 0.0, %v2253
        %v2255 = vpop.f32.mrf.mxu0
        %v2256 = vadd.f32 0.0, %v2255
        %2257 = vmatmul.bf16.gmra.mxu0 %v436
        %v2258 = vpop.f32.mrf.mxu0
        %v2259 = vadd.f32 0.0, %v2258
        %v2260 = vpop.f32.mrf.mxu0
        %v2261 = vadd.f32 0.0, %v2260
        %2262 = vmatmul.bf16.gmra.mxu0 %v439
        %v2263 = vpop.f32.mrf.mxu0
        %v2264 = vadd.f32 0.0, %v2263
        %v2265 = vpop.f32.mrf.mxu0
        %v2266 = vadd.f32 0.0, %v2265
        %2267 = vmatmul.bf16.gmra.mxu0 %v442
        %v2268 = vpop.f32.mrf.mxu0
        %v2269 = vadd.f32 0.0, %v2268
        %v2270 = vpop.f32.mrf.mxu0
        %v2271 = vadd.f32 0.0, %v2270
        %2272 = vmatmul.bf16.gmra.mxu0 %v445
        %v2273 = vpop.f32.mrf.mxu0
        %v2274 = vadd.f32 0.0, %v2273
        %v2275 = vpop.f32.mrf.mxu0
        %v2276 = vadd.f32 0.0, %v2275
        %2277 = vmatmul.bf16.gmra.mxu0 %v448
        %v2278 = vpop.f32.mrf.mxu0
        %v2279 = vadd.f32 0.0, %v2278
        %v2280 = vpop.f32.mrf.mxu0
        %v2281 = vadd.f32 0.0, %v2280
        %2282 = vmatmul.bf16.gmra.mxu0 %v451
        %v2283 = vpop.f32.mrf.mxu0
        %v2284 = vadd.f32 0.0, %v2283
        %v2285 = vpop.f32.mrf.mxu0
        %v2286 = vadd.f32 0.0, %v2285
        %2287 = vmatmul.bf16.gmra.mxu0 %v454
        %v2288 = vpop.f32.mrf.mxu0
        %v2289 = vadd.f32 0.0, %v2288
        %v2290 = vpop.f32.mrf.mxu0
        %v2291 = vadd.f32 0.0, %v2290
        %2292 = vmatmul.bf16.gmra.mxu0 %v457
        %v2293 = vpop.f32.mrf.mxu0
        %v2294 = vadd.f32 0.0, %v2293
        %v2295 = vpop.f32.mrf.mxu0
        %v2296 = vadd.f32 0.0, %v2295
        %2297 = vmatmul.bf16.gmra.mxu0 %v460
        %v2298 = vpop.f32.mrf.mxu0
        %v2299 = vadd.f32 0.0, %v2298
        %v2300 = vpop.f32.mrf.mxu0
        %v2301 = vadd.f32 0.0, %v2300
        %2302 = vmatmul.bf16.gmra.mxu0 %v463
        %v2303 = vpop.f32.mrf.mxu0
        %v2304 = vadd.f32 0.0, %v2303
        %v2305 = vpop.f32.mrf.mxu0
        %v2306 = vadd.f32 0.0, %v2305
        %2307 = vmatmul.bf16.gmra.mxu0 %v466
        %v2308 = vpop.f32.mrf.mxu0
        %v2309 = vadd.f32 0.0, %v2308
        %v2310 = vpop.f32.mrf.mxu0
        %v2311 = vadd.f32 0.0, %v2310
        %2312 = vmatmul.bf16.gmra.mxu0 %v469
        %v2313 = vpop.f32.mrf.mxu0
        %v2314 = vadd.f32 0.0, %v2313
        %v2315 = vpop.f32.mrf.mxu0
        %v2316 = vadd.f32 0.0, %v2315
        %2317 = vdwg.mxu0
        %v2319 = vsel %vm422, %v2208, 0
        %v2322 = vsel %vm422, %v2209, 0
        %v2325 = vsel %vm422, %v2210, 0
        %v2328 = vsel %vm422, %v2211, 0
        %v2331 = vsel %vm422, %v2212, 0
        %v2334 = vsel %vm422, %v2213, 0
        %v2337 = vsel %vm422, %v2214, 0
        %v2340 = vsel %vm422, %v2215, 0
        %v2343 = vsel %vm422, %v2216, 0
        %v2346 = vsel %vm422, %v2217, 0
        %v2349 = vsel %vm422, %v2218, 0
        %v2352 = vsel %vm422, %v2219, 0
        %v2355 = vsel %vm422, %v2220, 0
        %v2358 = vsel %vm422, %v2221, 0
        %v2361 = vsel %vm422, %v2222, 0
        %v2364 = vsel %vm422, %v2223, 0
        %v2367 = vsel %vm471, %v2224, 0
        %2369 = vmatpush.bf16.msra.mxu0 0
        %2370 = vmatpush.bf16.msra.mxu0 0
        %2371 = vmatpush.bf16.msra.mxu0 0
        %2372 = vmatpush.bf16.msra.mxu0 0
        %2373 = vmatpush.bf16.msra.mxu0 0
        %2374 = vmatpush.bf16.msra.mxu0 0
        %2375 = vmatpush.bf16.msra.mxu0 0
        %2376 = vmatpush.bf16.msra.mxu0 %v2367
        %2377 = vmatmul.bf16.gmra.mxu0 %v2319
        %v2378 = vpop.f32.mrf.mxu0
        %v2379 = vadd.f32 %v2239, %v2378
        %v2380 = vpop.f32.mrf.mxu0
        %v2381 = vadd.f32 %v2241, %v2380
        %2382 = vmatmul.bf16.gmra.mxu0 %v2322
        %v2383 = vpop.f32.mrf.mxu0
        %v2384 = vadd.f32 %v2244, %v2383
        %v2385 = vpop.f32.mrf.mxu0
        %v2386 = vadd.f32 %v2246, %v2385
        %2387 = vmatmul.bf16.gmra.mxu0 %v2325
        %v2388 = vpop.f32.mrf.mxu0
        %v2389 = vadd.f32 %v2249, %v2388
        %v2390 = vpop.f32.mrf.mxu0
        %v2391 = vadd.f32 %v2251, %v2390
        %2392 = vmatmul.bf16.gmra.mxu0 %v2328
        %v2393 = vpop.f32.mrf.mxu0
        %v2394 = vadd.f32 %v2254, %v2393
        %v2395 = vpop.f32.mrf.mxu0
        %v2396 = vadd.f32 %v2256, %v2395
        %2397 = vmatmul.bf16.gmra.mxu0 %v2331
        %v2398 = vpop.f32.mrf.mxu0
        %v2399 = vadd.f32 %v2259, %v2398
        %v2400 = vpop.f32.mrf.mxu0
        %v2401 = vadd.f32 %v2261, %v2400
        %2402 = vmatmul.bf16.gmra.mxu0 %v2334
        %v2403 = vpop.f32.mrf.mxu0
        %v2404 = vadd.f32 %v2264, %v2403
        %v2405 = vpop.f32.mrf.mxu0
        %v2406 = vadd.f32 %v2266, %v2405
        %2407 = vmatmul.bf16.gmra.mxu0 %v2337
        %v2408 = vpop.f32.mrf.mxu0
        %v2409 = vadd.f32 %v2269, %v2408
        %v2410 = vpop.f32.mrf.mxu0
        %v2411 = vadd.f32 %v2271, %v2410
        %2412 = vmatmul.bf16.gmra.mxu0 %v2340
        %v2413 = vpop.f32.mrf.mxu0
        %v2414 = vadd.f32 %v2274, %v2413
        %v2415 = vpop.f32.mrf.mxu0
        %v2416 = vadd.f32 %v2276, %v2415
        %2417 = vmatmul.bf16.gmra.mxu0 %v2343
        %v2418 = vpop.f32.mrf.mxu0
        %v2419 = vadd.f32 %v2279, %v2418
        %v2420 = vpop.f32.mrf.mxu0
        %v2421 = vadd.f32 %v2281, %v2420
        %2422 = vmatmul.bf16.gmra.mxu0 %v2346
        %v2423 = vpop.f32.mrf.mxu0
        %v2424 = vadd.f32 %v2284, %v2423
        %v2425 = vpop.f32.mrf.mxu0
        %v2426 = vadd.f32 %v2286, %v2425
        %2427 = vmatmul.bf16.gmra.mxu0 %v2349
        %v2428 = vpop.f32.mrf.mxu0
        %v2429 = vadd.f32 %v2289, %v2428
        %v2430 = vpop.f32.mrf.mxu0
        %v2431 = vadd.f32 %v2291, %v2430
        %2432 = vmatmul.bf16.gmra.mxu0 %v2352
        %v2433 = vpop.f32.mrf.mxu0
        %v2434 = vadd.f32 %v2294, %v2433
        %v2435 = vpop.f32.mrf.mxu0
        %v2436 = vadd.f32 %v2296, %v2435
        %2437 = vmatmul.bf16.gmra.mxu0 %v2355
        %v2438 = vpop.f32.mrf.mxu0
        %v2439 = vadd.f32 %v2299, %v2438
        %v2440 = vpop.f32.mrf.mxu0
        %v2441 = vadd.f32 %v2301, %v2440
        %2442 = vmatmul.bf16.gmra.mxu0 %v2358
        %v2443 = vpop.f32.mrf.mxu0
        %v2444 = vadd.f32 %v2304, %v2443
        %v2445 = vpop.f32.mrf.mxu0
        %v2446 = vadd.f32 %v2306, %v2445
        %2447 = vmatmul.bf16.gmra.mxu0 %v2361
        %v2448 = vpop.f32.mrf.mxu0
        %v2449 = vadd.f32 %v2309, %v2448
        %v2450 = vpop.f32.mrf.mxu0
        %v2451 = vadd.f32 %v2311, %v2450
        %2452 = vmatmul.bf16.gmra.mxu0 %v2364
        %v2453 = vpop.f32.mrf.mxu0
        %v2454 = vadd.f32 %v2314, %v2453
        %v2455 = vpop.f32.mrf.mxu0
        %v2456 = vadd.f32 %v2316, %v2455
        %2457 = vdwg.mxu0
        %v2458 = vld [vmem:[%s7] sm:$0x1]
        %v2460 = vperm.slane %v2458, 0
        %v2462 = vadd.f32 %v2379, %v2460
        %v2463 = vadd.f32 %v2381, %v2460
        %v2464 = vadd.f32 %v2384, %v2460
        %v2465 = vadd.f32 %v2386, %v2460
        %v2466 = vadd.f32 %v2389, %v2460
        %v2467 = vadd.f32 %v2391, %v2460
        %v2468 = vadd.f32 %v2394, %v2460
        %v2469 = vadd.f32 %v2396, %v2460
        %v2470 = vadd.f32 %v2399, %v2460
        %v2471 = vadd.f32 %v2401, %v2460
        %v2472 = vadd.f32 %v2404, %v2460
        %v2473 = vadd.f32 %v2406, %v2460
        %v2474 = vadd.f32 %v2409, %v2460
        %v2475 = vadd.f32 %v2411, %v2460
        %v2476 = vadd.f32 %v2414, %v2460
        %v2477 = vadd.f32 %v2416, %v2460
        %v2478 = vadd.f32 %v2419, %v2460
        %v2479 = vadd.f32 %v2421, %v2460
        %v2480 = vadd.f32 %v2424, %v2460
        %v2481 = vadd.f32 %v2426, %v2460
        %v2482 = vadd.f32 %v2429, %v2460
        %v2483 = vadd.f32 %v2431, %v2460
        %v2484 = vadd.f32 %v2434, %v2460
        %v2485 = vadd.f32 %v2436, %v2460
        %v2486 = vadd.f32 %v2439, %v2460
        %v2487 = vadd.f32 %v2441, %v2460
        %v2488 = vadd.f32 %v2444, %v2460
        %v2489 = vadd.f32 %v2446, %v2460
        %v2490 = vadd.f32 %v2449, %v2460
        %v2491 = vadd.f32 %v2451, %v2460
        %v2492 = vadd.f32 %v2454, %v2460
        %v2493 = vadd.f32 %v2456, %v2460
        %v2494 = vmax.f32 %v2462, 0.0
        %v2495 = vmax.f32 %v2463, 0.0
        %v2496 = vmax.f32 %v2464, 0.0
        %v2497 = vmax.f32 %v2465, 0.0
        %v2498 = vmax.f32 %v2466, 0.0
        %v2499 = vmax.f32 %v2467, 0.0
        %v2500 = vmax.f32 %v2468, 0.0
        %v2501 = vmax.f32 %v2469, 0.0
        %v2502 = vmax.f32 %v2470, 0.0
        %v2503 = vmax.f32 %v2471, 0.0
        %v2504 = vmax.f32 %v2472, 0.0
        %v2505 = vmax.f32 %v2473, 0.0
        %v2506 = vmax.f32 %v2474, 0.0
        %v2507 = vmax.f32 %v2475, 0.0
        %v2508 = vmax.f32 %v2476, 0.0
        %v2509 = vmax.f32 %v2477, 0.0
        %v2510 = vmax.f32 %v2478, 0.0
        %v2511 = vmax.f32 %v2479, 0.0
        %v2512 = vmax.f32 %v2480, 0.0
        %v2513 = vmax.f32 %v2481, 0.0
        %v2514 = vmax.f32 %v2482, 0.0
        %v2515 = vmax.f32 %v2483, 0.0
        %v2516 = vmax.f32 %v2484, 0.0
        %v2517 = vmax.f32 %v2485, 0.0
        %v2518 = vmax.f32 %v2486, 0.0
        %v2519 = vmax.f32 %v2487, 0.0
        %v2520 = vmax.f32 %v2488, 0.0
        %v2521 = vmax.f32 %v2489, 0.0
        %v2522 = vmax.f32 %v2490, 0.0
        %v2523 = vmax.f32 %v2491, 0.0
        %v2524 = vmax.f32 %v2492, 0.0
        %v2525 = vmax.f32 %v2493, 0.0
        %2526 = vst.msk [vmem:[%s298] sm:$0xff] %vm1830, %v2494
        %2527 = vst.msk [vmem:[%s298 + $0x8] sm:$0xff] %vm1830, %v2495
        %2528 = vst.msk [vmem:[%s298 + $0x10] sm:$0xff] %vm1830, %v2496
        %2529 = vst.msk [vmem:[%s298 + $0x18] sm:$0xff] %vm1830, %v2497
        %2530 = vst.msk [vmem:[%s298 + $0x20] sm:$0xff] %vm1830, %v2498
        %2531 = vst.msk [vmem:[%s298 + $0x28] sm:$0xff] %vm1830, %v2499
        %2532 = vst.msk [vmem:[%s298 + $0x30] sm:$0xff] %vm1830, %v2500
        %2533 = vst.msk [vmem:[%s298 + $0x38] sm:$0xff] %vm1830, %v2501
        %2534 = vst.msk [vmem:[%s298 + $0x40] sm:$0xff] %vm1830, %v2502
        %2535 = vst.msk [vmem:[%s298 + $0x48] sm:$0xff] %vm1830, %v2503
        %2536 = vst.msk [vmem:[%s298 + $0x50] sm:$0xff] %vm1830, %v2504
        %2537 = vst.msk [vmem:[%s298 + $0x58] sm:$0xff] %vm1830, %v2505
        %2538 = vst.msk [vmem:[%s298 + $0x60] sm:$0xff] %vm1830, %v2506
        %2539 = vst.msk [vmem:[%s298 + $0x68] sm:$0xff] %vm1830, %v2507
        %2540 = vst.msk [vmem:[%s298 + $0x70] sm:$0xff] %vm1830, %v2508
        %2541 = vst.msk [vmem:[%s298 + $0x78] sm:$0xff] %vm1830, %v2509
        %2542 = vst.msk [vmem:[%s298 + $0x80] sm:$0xff] %vm1830, %v2510
        %2543 = vst.msk [vmem:[%s298 + $0x88] sm:$0xff] %vm1830, %v2511
        %2544 = vst.msk [vmem:[%s298 + $0x90] sm:$0xff] %vm1830, %v2512
        %2545 = vst.msk [vmem:[%s298 + $0x98] sm:$0xff] %vm1830, %v2513
        %2546 = vst.msk [vmem:[%s298 + $0xa0] sm:$0xff] %vm1830, %v2514
        %2547 = vst.msk [vmem:[%s298 + $0xa8] sm:$0xff] %vm1830, %v2515
        %2548 = vst.msk [vmem:[%s298 + $0xb0] sm:$0xff] %vm1830, %v2516
        %2549 = vst.msk [vmem:[%s298 + $0xb8] sm:$0xff] %vm1830, %v2517
        %2550 = vst.msk [vmem:[%s298 + $0xc0] sm:$0xff] %vm1830, %v2518
        %2551 = vst.msk [vmem:[%s298 + $0xc8] sm:$0xff] %vm1830, %v2519
        %2552 = vst.msk [vmem:[%s298 + $0xd0] sm:$0xff] %vm1830, %v2520
        %2553 = vst.msk [vmem:[%s298 + $0xd8] sm:$0xff] %vm1830, %v2521
        %2554 = vst.msk [vmem:[%s298 + $0xe0] sm:$0xff] %vm1830, %v2522
        %2555 = vst.msk [vmem:[%s298 + $0xe8] sm:$0xff] %vm1830, %v2523
        %2556 = vst.msk [vmem:[%s298 + $0xf0] sm:$0xff] %vm1830, %v2524
        %2557 = vst.msk [vmem:[%s298 + $0xf8] sm:$0xff] %vm1830, %v2525
        %s2558 = sand.u32 %s203, 1
        %s2559 = scalar_lea.sflag [#allocation4], %s2558
        %s2560 = sand.u32 %s203, 1
        %s2561 = smul.addr %s2560, 256
        %s2562 = scalar_lea.vmem [#allocation3], %s2561
        // Predicated region
        $region53: #{tpu_custom_call.1} parent=51 // pred_check
          %p2563 = pneg %p213
        $region54: #{tpu_custom_call.1} parent=51 // pred_check_branch
          %2565 = sbr.rel (%p2563) target = $region56
        $region55: #{tpu_custom_call.1} parent=51 // pred_region
          %2567 = vsyncadd %s2559, 0
          %s2568 = smul.addr %s22, 32
          %s2569 = smul.addr %s2568, 8
          %s2570 = scalar_lea.hbm %s8, %s2569
          %s2571 = sshll.u32 %s2562, 4
          %s2572 = int_to_ptr.vmem [resolvable:$true] %s2571
          %s2573 = sshll.u32 %s2570, 4
          %s2574 = int_to_ptr.hbm [resolvable:$true] %s2573
          %2579 = dma.vmem_to_hbm [thread:$0]  %s2572, 4096, %s2574, %s2559, 128, 128, 8
        $region56: #{tpu_custom_call.1} parent=51 // pred_fallthru
          _
      $region52: #{tpu_custom_call.1} parent=5 // pred_fallthru
        _
      %p2580 = scmp.le.s32.totalorder 2, %s17
      // Predicated region
      $region57: #{tpu_custom_call.1} parent=5 // pred_check
        %p2581 = pneg %p2580
      $region58: #{tpu_custom_call.1} parent=5 // pred_check_branch
        %2583 = sbr.rel (%p2581) target = $region60
      $region59: #{tpu_custom_call.1} parent=5 // pred_region
        %s2584 = ssub.s32 %s17, 2
        // Predicated region
        $region61: #{tpu_custom_call.1} parent=59 // pred_check
          %p2585 = pneg %p219
        $region62: #{tpu_custom_call.1} parent=59 // pred_check_branch
          %2587 = sbr.rel (%p2585) target = $region64
        $region63: #{tpu_custom_call.1} parent=59 // pred_region
          %s2588 = sand.u32 %s204, 1
          %s2589 = scalar_lea.sflag [#allocation4], %s2588
          %s2590 = sand.u32 %s204, 1
          %s2591 = smul.addr %s2590, 256
          %s2592 = scalar_lea.vmem [#allocation3], %s2591
          %2594 = dma.done %s2589, 4096
        $region64: #{tpu_custom_call.1} parent=59 // pred_fallthru
          _
      $region60: #{tpu_custom_call.1} parent=5 // pred_fallthru
        _
    $region6: #{tpu_custom_call.1} parent=1 // loop_footer
      %s21 = sadd.s32 1, %s17
    $region7: #{tpu_custom_call.1} parent=1 // loop_footer_branch
      %16 = sbr.rel target = $region3
    $region8: #{tpu_custom_call.1} parent=1 // loop_exit
      _
    %2595 = vsyncpa [#allocation4], 1
    %s2596 = scalar_lea.sflag [#allocation4], 1
    %2597 = vsyncpa %s2596, 1

</llo_original>
